<compile_context>
chip_gen: v5e
topology: v5e:2x2
jax: 0.10.0
libtpu: 0.0.40
codegen_flags: <defaults>
</compile_context>

<pallas_src>
import functools

import jax
import jax.numpy as jnp
from jax import lax
from jax.experimental import pallas as pl
from jax.experimental.pallas import tpu as pltpu

EPS = 1e-5
LANE = 128


def _round_up(x, m):
    return (x + m - 1) // m * m


# --------------------------------------------------------------------------
# In-kernel helpers
# --------------------------------------------------------------------------
def _conv3x3_im2col(yv, w_ref, col_ref):
    """3x3 'SAME' conv of one (H, W, C) image as a single im2col matmul.

    yv      : (H, W, C) float32 value (already loaded)
    w_ref   : (9*C, Pout) ref, tap-major rows: row = (dh*3+dw)*C + c
    col_ref : (H, W, 9*C) VMEM scratch (matmul dtype)
    returns : (H*W, Pout) float32
    """
    H, W, C = yv.shape
    cdtype = col_ref.dtype
    xc = yv.astype(cdtype)                      # single cast, hoisted
    zrow = jnp.zeros((1, W, C), cdtype)         # halo fillers, hoisted
    zcol = jnp.zeros((H, 1, C), cdtype)
    for dh in range(3):
        for dw in range(3):
            oy, ox = dh - 1, dw - 1
            v = xc
            # shifted[h, w] = x[h+oy, w+ox], zero outside the image
            if oy < 0:
                v = jnp.concatenate([zrow, v[:H - 1]], axis=0)
            elif oy > 0:
                v = jnp.concatenate([v[1:], zrow], axis=0)
            if ox < 0:
                v = jnp.concatenate([zcol, v[:, :W - 1]], axis=1)
            elif ox > 0:
                v = jnp.concatenate([v[:, 1:], zcol], axis=1)
            c0 = (dh * 3 + dw) * C
            col_ref[:, :, c0:c0 + C] = v        # lane-aligned full-window store
    cols = col_ref[...].reshape(H * W, 9 * C)
    return jnp.dot(cols, w_ref[...], preferred_element_type=jnp.float32)


def _channel_stats(acc):
    """Per-channel sum and sum-of-squares of a (M, C) f32 block -> (2, C)."""
    s = jnp.sum(acc, axis=0, keepdims=True)
    sq = jnp.sum(acc * acc, axis=0, keepdims=True)
    return jnp.concatenate([s, sq], axis=0)


# --------------------------------------------------------------------------
# Phase kernels
# --------------------------------------------------------------------------
def conv1_stats_kernel(x_ref, w_ref, z_ref, stats_ref, col_ref):
    """Phase 1: conv1 + per-image partial BN1 statistics."""
    _, H, W, C = x_ref.shape
    P = w_ref.shape[-1]
    xv = x_ref[...].reshape(H, W, C)
    acc = _conv3x3_im2col(xv, w_ref, col_ref)               # (H*W, P) f32
    stats_ref[...] = _channel_stats(acc).reshape(1, 2, P)
    z_ref[...] = acc.reshape(1, H, W, P)


def bn1_relu_conv2_stats_kernel(z1_ref, scale_ref, shift_ref, w_ref,
                                z2_ref, stats_ref, col_ref):
    """Phase 2: bn1 (folded scale/shift) + relu, conv2, partial BN2 stats."""
    _, H, W, P = z1_ref.shape
    z1 = z1_ref[...].reshape(H, W, P)
    y1 = jnp.maximum(z1 * scale_ref[...] + shift_ref[...], 0.0)   # f32
    acc = _conv3x3_im2col(y1, w_ref, col_ref)
    stats_ref[...] = _channel_stats(acc).reshape(1, 2, P)
    z2_ref[...] = acc.reshape(1, H, W, P)


def bn2_residual_relu_kernel(z2_ref, x_ref, scale_ref, shift_ref, out_ref):
    """Phase 3: bn2 (folded) + residual add + relu."""
    y = z2_ref[...] * scale_ref[...] + shift_ref[...] + x_ref[...]
    out_ref[...] = jnp.maximum(y, 0.0)


# --------------------------------------------------------------------------
# Wrapper (PyTorch-style NCHW in / NCHW out)
# --------------------------------------------------------------------------
def _bn_scale_shift(stats, gamma, beta, n_px):
    """Reduce per-image (B, 2, C) partials into folded BN scale/shift."""
    s = jnp.sum(stats[:, 0, :], axis=0)
    sq = jnp.sum(stats[:, 1, :], axis=0)
    mean = s / n_px
    var = jnp.maximum(sq / n_px - mean * mean, 0.0)
    inv = lax.rsqrt(var + EPS)
    scale = gamma * inv
    shift = beta - mean * scale
    return scale.reshape(1, -1), shift.reshape(1, -1)


def basic_block(x_nchw, w1, w2, g1, b1, g2, b2, *, matmul_dtype=jnp.bfloat16):
    x = jnp.transpose(x_nchw, (0, 2, 3, 1)).astype(jnp.float32)   # -> NHWC
    B, H, W, C = x.shape
    P = w1.shape[-1]
    assert C == P, "stride=1 / downsample=None requires inplanes == planes"
    # TODO(synk): stride > 1 and a `downsample` branch are not supported.

    Cp = max(_round_up(C, LANE), LANE)
    Pp = max(_round_up(P, LANE), LANE)
    mm_bytes = jnp.dtype(matmul_dtype).itemsize
    n_px = B * H * W

    # Pad channels to lane multiples; fold taps into K; pre-cast weights.
    xp = jnp.pad(x, ((0, 0), (0, 0), (0, 0), (0, Cp - C)))
    w1r = jnp.pad(w1.astype(jnp.float32),
                  ((0, 0), (0, 0), (0, Cp - C), (0, Pp - P))
                  ).reshape(9 * Cp, Pp).astype(matmul_dtype)
    w2r = jnp.pad(w2.astype(jnp.float32),
                  ((0, 0), (0, 0), (0, Pp - P), (0, Pp - P))
                  ).reshape(9 * Pp, Pp).astype(matmul_dtype)
    g1p = jnp.pad(g1.astype(jnp.float32), (0, Pp - P))
    b1p = jnp.pad(b1.astype(jnp.float32), (0, Pp - P))
    g2p = jnp.pad(g2.astype(jnp.float32), (0, Pp - P))
    b2p = jnp.pad(b2.astype(jnp.float32), (0, Pp - P))

    cparams = pltpu.CompilerParams(
        dimension_semantics=("parallel",),
        vmem_limit_bytes=64 * 1024 * 1024,
    )

    img_spec_in = pl.BlockSpec((1, H, W, Cp), lambda b: (b, 0, 0, 0))
    img_spec_out = pl.BlockSpec((1, H, W, Pp), lambda b: (b, 0, 0, 0))
    stats_spec = pl.BlockSpec((1, 2, Pp), lambda b: (b, 0, 0))
    vec_spec = pl.BlockSpec((1, Pp), lambda b: (0, 0))

    # -------- phase 1: conv1 + partial BN1 stats --------
    z1, stats1 = pl.pallas_call(
        conv1_stats_kernel,
        grid=(B,),
        in_specs=[img_spec_in,
                  pl.BlockSpec((9 * Cp, Pp), lambda b: (0, 0))],
        out_specs=[img_spec_out, stats_spec],
        out_shape=[jax.ShapeDtypeStruct((B, H, W, Pp), jnp.float32),
                   jax.ShapeDtypeStruct((B, 2, Pp), jnp.float32)],
        scratch_shapes=[pltpu.VMEM((H, W, 9 * Cp), matmul_dtype)],
        compiler_params=cparams,
        cost_estimate=pl.CostEstimate(
            flops=2 * n_px * 9 * Cp * Pp,
            transcendentals=0,
            bytes_accessed=(n_px * Cp * 4 + 9 * Cp * Pp * mm_bytes
                            + n_px * Pp * 4 + B * 2 * Pp * 4)),
    )(xp, w1r)

    scale1, shift1 = _bn_scale_shift(stats1, g1p, b1p, n_px)

    # -------- phase 2: bn1+relu -> conv2 + partial BN2 stats --------
    z2, stats2 = pl.pallas_call(
        bn1_relu_conv2_stats_kernel,
        grid=(B,),
        in_specs=[img_spec_out, vec_spec, vec_spec,
                  pl.BlockSpec((9 * Pp, Pp), lambda b: (0, 0))],
        out_specs=[img_spec_out, stats_spec],
        out_shape=[jax.ShapeDtypeStruct((B, H, W, Pp), jnp.float32),
                   jax.ShapeDtypeStruct((B, 2, Pp), jnp.float32)],
        scratch_shapes=[pltpu.VMEM((H, W, 9 * Pp), matmul_dtype)],
        compiler_params=cparams,
        cost_estimate=pl.CostEstimate(
            flops=2 * n_px * 9 * Pp * Pp + 3 * n_px * Pp,
            transcendentals=0,
            bytes_accessed=(n_px * Pp * 4 + 9 * Pp * Pp * mm_bytes
                            + n_px * Pp * 4 + B * 2 * Pp * 4 + 4 * Pp * 4)),
    )(z1, scale1, shift1, w2r)

    scale2, shift2 = _bn_scale_shift(stats2, g2p, b2p, n_px)

    # -------- phase 3: bn2 + residual + relu --------
    out_p = pl.pallas_call(
        bn2_residual_relu_kernel,
        grid=(B,),
        in_specs=[img_spec_out, img_spec_in, vec_spec, vec_spec],
        out_specs=img_spec_out,
        out_shape=jax.ShapeDtypeStruct((B, H, W, Pp), jnp.float32),
        compiler_params=cparams,
        cost_estimate=pl.CostEstimate(
            flops=4 * n_px * Pp,
            transcendentals=0,
            bytes_accessed=3 * n_px * Pp * 4 + 4 * Pp * 4),
    )(z2, xp, scale2, shift2)

    out = out_p[..., :P]
    return jnp.transpose(out, (0, 3, 1, 2))                   # -> NCHW


# --------------------------------------------------------------------------
# Pure-JAX reference (module semantics); conv_dtype mirrors MXU operand dtype
# --------------------------------------------------------------------------
def basic_block_reference(x_nchw, w1, w2, g1, b1, g2, b2, *,
                          conv_dtype=jnp.float32):
    x = jnp.transpose(x_nchw, (0, 2, 3, 1)).astype(jnp.float32)

    def conv(inp, w):
        return lax.conv_general_dilated(
            inp.astype(conv_dtype), w.astype(conv_dtype),
            window_strides=(1, 1), padding="SAME",
            dimension_numbers=("NHWC", "HWIO", "NHWC"),
            preferred_element_type=jnp.float32,
            precision=lax.Precision.HIGHEST)

    def bn(y, g, b):
        mean = jnp.mean(y, axis=(0, 1, 2))
        var = jnp.mean((y - mean) ** 2, axis=(0, 1, 2))
        return (y - mean) * lax.rsqrt(var + EPS) * g + b

    o = jax.nn.relu(bn(conv(x, w1), g1, b1))
    o = bn(conv(o, w2), g2, b2) + x
    return jnp.transpose(jax.nn.relu(o), (0, 3, 1, 2))


if __name__ == "__main__":
    key = jax.random.PRNGKey(0)
    B, C, H, W = 2, 4, 16, 16
    planes = C   # stride=1, downsample=None => inplanes == planes

    kx, kw1, kw2 = jax.random.split(key, 3)
    x = jax.random.normal(kx, (B, C, H, W), jnp.float32)
    w1 = 0.1 * jax.random.normal(kw1, (3, 3, C, planes), jnp.float32)
    w2 = 0.1 * jax.random.normal(kw2, (3, 3, planes, planes), jnp.float32)
    g1 = jnp.ones((planes,), jnp.float32)
    b1 = jnp.zeros((planes,), jnp.float32)
    g2 = jnp.ones((planes,), jnp.float32)
    b2 = jnp.zeros((planes,), jnp.float32)

    # f32-operand configuration: tight check of the fused structure / BN math.
    out32 = jax.block_until_ready(
        basic_block(x, w1, w2, g1, b1, g2, b2, matmul_dtype=jnp.float32))
    ref32 = jax.block_until_ready(
        basic_block_reference(x, w1, w2, g1, b1, g2, b2,
                              conv_dtype=jnp.float32))
    assert out32.shape == (B, planes, H, W), out32.shape
    assert jnp.allclose(out32, ref32, atol=1e-3, rtol=1e-3), float(
        jnp.max(jnp.abs(out32 - ref32)))

    # bf16-operand configuration (the recommended MXU precision on v6e/v7x),
    # compared against a reference using the same bf16-operand / f32-accum
    # conv precision.
    outbf = jax.block_until_ready(
        basic_block(x, w1, w2, g1, b1, g2, b2, matmul_dtype=jnp.bfloat16))
    refbf = jax.block_until_ready(
        basic_block_reference(x, w1, w2, g1, b1, g2, b2,
                              conv_dtype=jnp.bfloat16))
    assert outbf.shape == (B, planes, H, W), outbf.shape
    assert jnp.allclose(outbf, refbf, atol=2e-2, rtol=2e-2), float(
        jnp.max(jnp.abs(outbf - refbf)))

    print("KERNEL_OK")
</pallas_src>

<mosaic_0001>
module attributes {stable_mosaic.version = 11 : i64} {
  func.func @conv1_stats_kernel(%arg0: i32, %arg1: memref<1x16x16x128xf32, #tpu.memory_space<vmem>>, %arg2: memref<1152x128xf32, #tpu.memory_space<vmem>>, %arg3: memref<1x16x16x128xf32, #tpu.memory_space<vmem>>, %arg4: memref<1x2x128xf32, #tpu.memory_space<vmem>>, %arg5: memref<16x16x1152xf32, #tpu.memory_space<vmem>>) attributes {dimension_semantics = [#tpu.dimension_semantics<parallel>], iteration_bounds = array<i64: 2>, scalar_prefetch = 0 : i64, scratch_operands = 1 : i64, tpu.core_type = #tpu.core_type<tc>, window_params = [{transform_indices = @transform_0, window_bounds = array<i64: 1, 16, 16, 128>}, {pipeline_mode = #tpu.pipeline_mode<synchronous>, transform_indices = @transform_1, window_bounds = array<i64: 1152, 128>}, {transform_indices = @transform_2, window_bounds = array<i64: 1, 16, 16, 128>}, {transform_indices = @transform_3, window_bounds = array<i64: 1, 2, 128>}]} {
    %c0 = arith.constant 0 : index
    %c0_0 = arith.constant 0 : index
    %c0_1 = arith.constant 0 : index
    %c0_2 = arith.constant 0 : index
    %0 = vector.load %arg1[%c0, %c0_0, %c0_1, %c0_2] : memref<1x16x16x128xf32, #tpu.memory_space<vmem>>, vector<1x16x16x128xf32>
    %1 = vector.shape_cast %0 : vector<1x16x16x128xf32> to vector<16x16x128xf32>
    %cst = arith.constant 0.000000e+00 : f32
    %2 = vector.broadcast %cst : f32 to vector<1x16x128xf32>
    %cst_3 = arith.constant 0.000000e+00 : f32
    %3 = vector.broadcast %cst_3 : f32 to vector<16x1x128xf32>
    %4 = vector.extract_strided_slice %1 {offsets = [0, 0, 0], sizes = [15, 16, 128], strides = [1, 1, 1]} : vector<16x16x128xf32> to vector<15x16x128xf32>
    %5 = tpu.concatenate %2, %4 in 0 : vector<1x16x128xf32>, vector<15x16x128xf32> -> vector<16x16x128xf32>
    %6 = vector.extract_strided_slice %5 {offsets = [0, 0, 0], sizes = [16, 15, 128], strides = [1, 1, 1]} : vector<16x16x128xf32> to vector<16x15x128xf32>
    %7 = tpu.concatenate %3, %6 in 1 : vector<16x1x128xf32>, vector<16x15x128xf32> -> vector<16x16x128xf32>
    %c0_4 = arith.constant 0 : index
    %c0_5 = arith.constant 0 : index
    %c0_6 = arith.constant 0 : index
    %8 = vector.load %arg5[%c0_4, %c0_5, %c0_6] : memref<16x16x1152xf32, #tpu.memory_space<vmem>>, vector<16x16x128xf32>
    tpu.vector_store %arg5[%c0_4, %c0_5, %c0_6], %7 {strides = array<i32>} : memref<16x16x1152xf32, #tpu.memory_space<vmem>>, vector<16x16x128xf32>,
    %9 = vector.extract_strided_slice %1 {offsets = [0, 0, 0], sizes = [15, 16, 128], strides = [1, 1, 1]} : vector<16x16x128xf32> to vector<15x16x128xf32>
    %10 = tpu.concatenate %2, %9 in 0 : vector<1x16x128xf32>, vector<15x16x128xf32> -> vector<16x16x128xf32>
    %c0_7 = arith.constant 0 : index
    %c0_8 = arith.constant 0 : index
    %c128 = arith.constant 128 : index
    %11 = vector.load %arg5[%c0_7, %c0_8, %c128] : memref<16x16x1152xf32, #tpu.memory_space<vmem>>, vector<16x16x128xf32>
    tpu.vector_store %arg5[%c0_7, %c0_8, %c128], %10 {strides = array<i32>} : memref<16x16x1152xf32, #tpu.memory_space<vmem>>, vector<16x16x128xf32>,
    %12 = vector.extract_strided_slice %1 {offsets = [0, 0, 0], sizes = [15, 16, 128], strides = [1, 1, 1]} : vector<16x16x128xf32> to vector<15x16x128xf32>
    %13 = tpu.concatenate %2, %12 in 0 : vector<1x16x128xf32>, vector<15x16x128xf32> -> vector<16x16x128xf32>
    %14 = vector.extract_strided_slice %13 {offsets = [0, 1, 0], sizes = [16, 15, 128], strides = [1, 1, 1]} : vector<16x16x128xf32> to vector<16x15x128xf32>
    %15 = tpu.concatenate %14, %3 in 1 : vector<16x15x128xf32>, vector<16x1x128xf32> -> vector<16x16x128xf32>
    %c0_9 = arith.constant 0 : index
    %c0_10 = arith.constant 0 : index
    %c256 = arith.constant 256 : index
    %16 = vector.load %arg5[%c0_9, %c0_10, %c256] : memref<16x16x1152xf32, #tpu.memory_space<vmem>>, vector<16x16x128xf32>
    tpu.vector_store %arg5[%c0_9, %c0_10, %c256], %15 {strides = array<i32>} : memref<16x16x1152xf32, #tpu.memory_space<vmem>>, vector<16x16x128xf32>,
    %17 = vector.extract_strided_slice %1 {offsets = [0, 0, 0], sizes = [16, 15, 128], strides = [1, 1, 1]} : vector<16x16x128xf32> to vector<16x15x128xf32>
    %18 = tpu.concatenate %3, %17 in 1 : vector<16x1x128xf32>, vector<16x15x128xf32> -> vector<16x16x128xf32>
    %c0_11 = arith.constant 0 : index
    %c0_12 = arith.constant 0 : index
    %c384 = arith.constant 384 : index
    %19 = vector.load %arg5[%c0_11, %c0_12, %c384] : memref<16x16x1152xf32, #tpu.memory_space<vmem>>, vector<16x16x128xf32>
    tpu.vector_store %arg5[%c0_11, %c0_12, %c384], %18 {strides = array<i32>} : memref<16x16x1152xf32, #tpu.memory_space<vmem>>, vector<16x16x128xf32>,
    %c0_13 = arith.constant 0 : index
    %c0_14 = arith.constant 0 : index
    %c512 = arith.constant 512 : index
    %20 = vector.load %arg5[%c0_13, %c0_14, %c512] : memref<16x16x1152xf32, #tpu.memory_space<vmem>>, vector<16x16x128xf32>
    tpu.vector_store %arg5[%c0_13, %c0_14, %c512], %1 {strides = array<i32>} : memref<16x16x1152xf32, #tpu.memory_space<vmem>>, vector<16x16x128xf32>,
    %21 = vector.extract_strided_slice %1 {offsets = [0, 1, 0], sizes = [16, 15, 128], strides = [1, 1, 1]} : vector<16x16x128xf32> to vector<16x15x128xf32>
    %22 = tpu.concatenate %21, %3 in 1 : vector<16x15x128xf32>, vector<16x1x128xf32> -> vector<16x16x128xf32>
    %c0_15 = arith.constant 0 : index
    %c0_16 = arith.constant 0 : index
    %c640 = arith.constant 640 : index
    %23 = vector.load %arg5[%c0_15, %c0_16, %c640] : memref<16x16x1152xf32, #tpu.memory_space<vmem>>, vector<16x16x128xf32>
    tpu.vector_store %arg5[%c0_15, %c0_16, %c640], %22 {strides = array<i32>} : memref<16x16x1152xf32, #tpu.memory_space<vmem>>, vector<16x16x128xf32>,
    %24 = vector.extract_strided_slice %1 {offsets = [1, 0, 0], sizes = [15, 16, 128], strides = [1, 1, 1]} : vector<16x16x128xf32> to vector<15x16x128xf32>
    %25 = tpu.concatenate %24, %2 in 0 : vector<15x16x128xf32>, vector<1x16x128xf32> -> vector<16x16x128xf32>
    %26 = vector.extract_strided_slice %25 {offsets = [0, 0, 0], sizes = [16, 15, 128], strides = [1, 1, 1]} : vector<16x16x128xf32> to vector<16x15x128xf32>
    %27 = tpu.concatenate %3, %26 in 1 : vector<16x1x128xf32>, vector<16x15x128xf32> -> vector<16x16x128xf32>
    %c0_17 = arith.constant 0 : index
    %c0_18 = arith.constant 0 : index
    %c768 = arith.constant 768 : index
    %28 = vector.load %arg5[%c0_17, %c0_18, %c768] : memref<16x16x1152xf32, #tpu.memory_space<vmem>>, vector<16x16x128xf32>
    tpu.vector_store %arg5[%c0_17, %c0_18, %c768], %27 {strides = array<i32>} : memref<16x16x1152xf32, #tpu.memory_space<vmem>>, vector<16x16x128xf32>,
    %29 = vector.extract_strided_slice %1 {offsets = [1, 0, 0], sizes = [15, 16, 128], strides = [1, 1, 1]} : vector<16x16x128xf32> to vector<15x16x128xf32>
    %30 = tpu.concatenate %29, %2 in 0 : vector<15x16x128xf32>, vector<1x16x128xf32> -> vector<16x16x128xf32>
    %c0_19 = arith.constant 0 : index
    %c0_20 = arith.constant 0 : index
    %c896 = arith.constant 896 : index
    %31 = vector.load %arg5[%c0_19, %c0_20, %c896] : memref<16x16x1152xf32, #tpu.memory_space<vmem>>, vector<16x16x128xf32>
    tpu.vector_store %arg5[%c0_19, %c0_20, %c896], %30 {strides = array<i32>} : memref<16x16x1152xf32, #tpu.memory_space<vmem>>, vector<16x16x128xf32>,
    %32 = vector.extract_strided_slice %1 {offsets = [1, 0, 0], sizes = [15, 16, 128], strides = [1, 1, 1]} : vector<16x16x128xf32> to vector<15x16x128xf32>
    %33 = tpu.concatenate %32, %2 in 0 : vector<15x16x128xf32>, vector<1x16x128xf32> -> vector<16x16x128xf32>
    %34 = vector.extract_strided_slice %33 {offsets = [0, 1, 0], sizes = [16, 15, 128], strides = [1, 1, 1]} : vector<16x16x128xf32> to vector<16x15x128xf32>
    %35 = tpu.concatenate %34, %3 in 1 : vector<16x15x128xf32>, vector<16x1x128xf32> -> vector<16x16x128xf32>
    %c0_21 = arith.constant 0 : index
    %c0_22 = arith.constant 0 : index
    %c1024 = arith.constant 1024 : index
    %36 = vector.load %arg5[%c0_21, %c0_22, %c1024] : memref<16x16x1152xf32, #tpu.memory_space<vmem>>, vector<16x16x128xf32>
    tpu.vector_store %arg5[%c0_21, %c0_22, %c1024], %35 {strides = array<i32>} : memref<16x16x1152xf32, #tpu.memory_space<vmem>>, vector<16x16x128xf32>,
    %c0_23 = arith.constant 0 : index
    %c0_24 = arith.constant 0 : index
    %c0_25 = arith.constant 0 : index
    %37 = vector.load %arg5[%c0_23, %c0_24, %c0_25] : memref<16x16x1152xf32, #tpu.memory_space<vmem>>, vector<16x16x1152xf32>
    %38 = vector.shape_cast %37 : vector<16x16x1152xf32> to vector<256x1152xf32>
    %c0_26 = arith.constant 0 : index
    %c0_27 = arith.constant 0 : index
    %39 = vector.load %arg2[%c0_26, %c0_27] : memref<1152x128xf32, #tpu.memory_space<vmem>>, vector<1152x128xf32>
    %cst_28 = arith.constant dense<0.000000e+00> : vector<256x128xf32>
    %40 = tpu.matmul %38, %39, %cst_28 {dimension_numbers = #tpu.dot_dimension_numbers<[1], [0], [0], [1], [0, 0, 1, 1], [], []>} : vector<256x1152xf32>, vector<1152x128xf32>, vector<256x128xf32> -> vector<256x128xf32>
    %cst_29 = arith.constant dense<0.000000e+00> : vector<128xf32>
    %41 = vector.multi_reduction <add>, %40, %cst_29 [0] : vector<256x128xf32> to vector<128xf32>
    %42 = vector.shape_cast %41 : vector<128xf32> to vector<1x128xf32>
    %43 = arith.mulf %40, %40 : vector<256x128xf32>
    %cst_30 = arith.constant dense<0.000000e+00> : vector<128xf32>
    %44 = vector.multi_reduction <add>, %43, %cst_30 [0] : vector<256x128xf32> to vector<128xf32>
    %45 = vector.shape_cast %44 : vector<128xf32> to vector<1x128xf32>
    %46 = tpu.concatenate %42, %45 in 0 : vector<1x128xf32>, vector<1x128xf32> -> vector<2x128xf32>
    %47 = vector.shape_cast %46 : vector<2x128xf32> to vector<1x2x128xf32>
    %c0_31 = arith.constant 0 : index
    %c0_32 = arith.constant 0 : index
    %c0_33 = arith.constant 0 : index
    %48 = vector.load %arg4[%c0_31, %c0_32, %c0_33] : memref<1x2x128xf32, #tpu.memory_space<vmem>>, vector<1x2x128xf32>
    tpu.vector_store %arg4[%c0_31, %c0_32, %c0_33], %47 {strides = array<i32>} : memref<1x2x128xf32, #tpu.memory_space<vmem>>, vector<1x2x128xf32>,
    %49 = vector.shape_cast %40 : vector<256x128xf32> to vector<1x16x16x128xf32>
    %c0_34 = arith.constant 0 : index
    %c0_35 = arith.constant 0 : index
    %c0_36 = arith.constant 0 : index
    %c0_37 = arith.constant 0 : index
    %50 = vector.load %arg3[%c0_34, %c0_35, %c0_36, %c0_37] : memref<1x16x16x128xf32, #tpu.memory_space<vmem>>, vector<1x16x16x128xf32>
    tpu.vector_store %arg3[%c0_34, %c0_35, %c0_36, %c0_37], %49 {strides = array<i32>} : memref<1x16x16x128xf32, #tpu.memory_space<vmem>>, vector<1x16x16x128xf32>,
    return
  }
  func.func @transform_0(%arg0: i32) -> (i32, i32, i32, i32) {
    %c0_i32 = arith.constant 0 : i32
    %c0_i32_0 = arith.constant 0 : i32
    %c0_i32_1 = arith.constant 0 : i32
    %c0_i32_2 = arith.constant 0 : i32
    return %arg0, %c0_i32, %c0_i32_0, %c0_i32_1 : i32, i32, i32, i32
  }
  func.func @transform_1(%arg0: i32) -> (i32, i32) {
    %c0_i32 = arith.constant 0 : i32
    %c0_i32_0 = arith.constant 0 : i32
    %c0_i32_1 = arith.constant 0 : i32
    return %c0_i32, %c0_i32_0 : i32, i32
  }
  func.func @transform_2(%arg0: i32) -> (i32, i32, i32, i32) {
    %c0_i32 = arith.constant 0 : i32
    %c0_i32_0 = arith.constant 0 : i32
    %c0_i32_1 = arith.constant 0 : i32
    %c0_i32_2 = arith.constant 0 : i32
    return %arg0, %c0_i32, %c0_i32_0, %c0_i32_1 : i32, i32, i32, i32
  }
  func.func @transform_3(%arg0: i32) -> (i32, i32, i32) {
    %c0_i32 = arith.constant 0 : i32
    %c0_i32_0 = arith.constant 0 : i32
    %c0_i32_1 = arith.constant 0 : i32
    return %arg0, %c0_i32, %c0_i32_0 : i32, i32, i32
  }
}

</mosaic_0001>

<llo_original>
// kernel: tpu_custom_call.1
$region0: #{tpu_custom_call.1}
  #allocation0 [shape = 'u32[]', space=smem, size = 0x4, offset = 0x4, fixed_abs, tag = 'smem constant byte address 0x4 - core index']
  #allocation1 [shape = 'u32[72,128]{1,0:T(1,128)}', space=vmem, size = 0x9000, scoped, tag = 'internal scratch']
  #allocation2 [shape = 'f32[16,16,1152]{2,1,0:T(8,128)}', space=vmem, size = 0x120000, scoped, tag = 'scratch operand']
  %s0 = inlined_call_operand.hbm [shape: f32[2,16,16,128], index: 0, kind: input, shape index: {}]
  %s1 = inlined_call_operand.hbm [shape: f32[1152,128], index: 1, kind: input, shape index: {}]
  %s2 = inlined_call_operand.hbm [shape: f32[2,16,16,128], index: 2, kind: output, shape index: {0}]
  %s3 = inlined_call_operand.hbm [shape: f32[2,2,128], index: 3, kind: output, shape index: {1}]
  %4 = xla_tuple %s2, %s3
  %s5 = sld [smem:[#allocation0]]
  $region57: #{tpu_custom_call.1} parent=0
    _
  %s7 = ssub.s32 1, %s5
  %s8 = scalar_select 0, %s7, %s5
  $region1: #{tpu_custom_call.1} parent=0
    #allocation3 [shape = 'u8[262144]{0}', space=vmem, size = 0x40000, scoped, tag = 'input window, operand 0']
    #allocation4 [shape = 's32[2]{0}', space=sflag, size = 0x8, scoped, tag = 'scoped memory for tpu_custom_call.1']
    #allocation5 [shape = 's32[2]{0}', space=sflag, size = 0x8, scoped, tag = 'scoped memory for tpu_custom_call.1']
    #allocation6 [shape = 'u8[589824]{0}', space=vmem, size = 0x90000, scoped, tag = 'input window, operand 1, single buffered']
    #allocation7 [shape = 's32[1]{0}', space=sflag, size = 0x4, scoped, tag = 'scoped memory for tpu_custom_call.1']
    #allocation8 [shape = 'u8[262144]{0}', space=vmem, size = 0x40000, scoped, tag = 'output window, operand 0']
    #allocation9 [shape = 'u8[2048]{0}', space=vmem, size = 0x800, scoped, tag = 'output window, operand 1']
    #allocation10 [shape = 's32[2]{0}', space=sflag, size = 0x8, scoped, tag = 'scoped memory for tpu_custom_call.1']
    %9 = vsyncpa [#allocation4], 0
    %s10 = scalar_lea.sflag [#allocation4], 1
    %11 = vsyncpa %s10, 0
    %12 = vsyncpa [#allocation7], 0
    %13 = vsyncpa [#allocation5], 0
    %s14 = scalar_lea.sflag [#allocation5], 1
    %15 = vsyncpa %s14, 0
    %16 = vsyncpa [#allocation10], 0
    %s17 = scalar_lea.sflag [#allocation10], 1
    %18 = vsyncpa %s17, 0
    loop: start=0, step=1, limit=4
    $region2: #{tpu_custom_call.1} parent=1 // loop_pre_header
      _
    $region3: #{tpu_custom_call.1} parent=1 // loop_header
      %s20 = sphi 0, %s24
      %p21 = scmp.ge.s32.totalorder %s20, 4
      %s30 = sphi 0, %s32
      %s33 = sphi 0, %s30
      %s34 = sphi 0, %s33
      %s50 = sphi 0, %s34
      %s54 = sphi 0, %s54
      %s56 = sphi 0, %s54
      %s57 = sphi 0, %s56
      %s71 = sphi 0, %s57
      %s77 = sphi 0, %s79
      %s80 = sphi 0, %s77
      %s81 = sphi 0, %s80
      %s97 = sphi 0, %s81
      %s103 = sphi 0, %s105
      %s106 = sphi 0, %s103
      %s107 = sphi 0, %s106
      %s123 = sphi 0, %s107
    $region4: #{tpu_custom_call.1} parent=1 // loop_header_branch
      %23 = sbr.rel (%p21) target = $region8
    $region5: #{tpu_custom_call.1} parent=1 // loop_body
      %s25 = ssub.s32 %s20, 1
      %s26 = ssub.s32 %s20, 2
      %s27 = sadd.s32 %s20, 1
      %s28 = ssub.s32 %s20, %s27
      %p29 = scmp.eq.s32.totalorder %s28, 0
      %s31 = sadd.s32 %s30, 1
      %s32 = scalar_select %p29, %s30, %s31
      %p35 = pneg %p29
      %p36 = scmp.eq.s32.totalorder %s20, 1
      %p37 = por %p35, %p36
      %p38 = scmp.ne.s32.totalorder %s30, %s33
      %p39 = scmp.eq.s32.totalorder %s20, 0
      %p40 = por %p38, %p39
      %p41 = scmp.ne.s32.totalorder %s30, %s33
      %p42 = scmp.eq.s32.totalorder %s25, 1
      %p43 = por %p41, %p42
      %p44 = scmp.ne.s32.totalorder %s33, %s34
      %p45 = scmp.eq.s32.totalorder %s25, 0
      %p46 = por %p44, %p45
      %p47 = scmp.ne.s32.totalorder %s33, %s34
      %p48 = scmp.eq.s32.totalorder %s26, 1
      %p49 = por %p47, %p48
      %p51 = scmp.ne.s32.totalorder %s34, %s50
      %p52 = scmp.eq.s32.totalorder %s26, 0
      %p53 = por %p51, %p52
      %s55 = sadd.s32 %s54, 1
      %p58 = scmp.eq.s32.totalorder %s20, 1
      %p59 = scmp.ne.s32.totalorder %s54, %s56
      %p60 = scmp.eq.s32.totalorder %s20, 0
      %p61 = por %p59, %p60
      %p62 = scmp.ne.s32.totalorder %s54, %s56
      %p63 = scmp.eq.s32.totalorder %s25, 1
      %p64 = por %p62, %p63
      %p65 = scmp.ne.s32.totalorder %s56, %s57
      %p66 = scmp.eq.s32.totalorder %s25, 0
      %p67 = por %p65, %p66
      %p68 = scmp.ne.s32.totalorder %s56, %s57
      %p69 = scmp.eq.s32.totalorder %s26, 1
      %p70 = por %p68, %p69
      %p72 = scmp.ne.s32.totalorder %s57, %s71
      %p73 = scmp.eq.s32.totalorder %s26, 0
      %p74 = por %p72, %p73
      %s75 = ssub.s32 %s20, %s27
      %p76 = scmp.eq.s32.totalorder %s75, 0
      %s78 = sadd.s32 %s77, 1
      %s79 = scalar_select %p76, %s77, %s78
      %p82 = pneg %p76
      %p83 = scmp.eq.s32.totalorder %s20, 1
      %p84 = por %p82, %p83
      %p85 = scmp.ne.s32.totalorder %s77, %s80
      %p86 = scmp.eq.s32.totalorder %s20, 0
      %p87 = por %p85, %p86
      %p88 = scmp.ne.s32.totalorder %s77, %s80
      %p89 = scmp.eq.s32.totalorder %s25, 1
      %p90 = por %p88, %p89
      %p91 = scmp.ne.s32.totalorder %s80, %s81
      %p92 = scmp.eq.s32.totalorder %s25, 0
      %p93 = por %p91, %p92
      %p94 = scmp.ne.s32.totalorder %s80, %s81
      %p95 = scmp.eq.s32.totalorder %s26, 1
      %p96 = por %p94, %p95
      %p98 = scmp.ne.s32.totalorder %s81, %s97
      %p99 = scmp.eq.s32.totalorder %s26, 0
      %p100 = por %p98, %p99
      %s101 = ssub.s32 %s20, %s27
      %p102 = scmp.eq.s32.totalorder %s101, 0
      %s104 = sadd.s32 %s103, 1
      %s105 = scalar_select %p102, %s103, %s104
      %p108 = pneg %p102
      %p109 = scmp.eq.s32.totalorder %s20, 1
      %p110 = por %p108, %p109
      %p111 = scmp.ne.s32.totalorder %s103, %s106
      %p112 = scmp.eq.s32.totalorder %s20, 0
      %p113 = por %p111, %p112
      %p114 = scmp.ne.s32.totalorder %s103, %s106
      %p115 = scmp.eq.s32.totalorder %s25, 1
      %p116 = por %p114, %p115
      %p117 = scmp.ne.s32.totalorder %s106, %s107
      %p118 = scmp.eq.s32.totalorder %s25, 0
      %p119 = por %p117, %p118
      %p120 = scmp.ne.s32.totalorder %s106, %s107
      %p121 = scmp.eq.s32.totalorder %s26, 1
      %p122 = por %p120, %p121
      %p124 = scmp.ne.s32.totalorder %s107, %s123
      %p125 = scmp.eq.s32.totalorder %s26, 0
      %p126 = por %p124, %p125
      %p127 = scmp.le.s32.totalorder 1, %s20
      %p128 = scmp.lt.s32.totalorder %s20, 3
      %p129 = pnand %p127, %p128
      %p130 = pneg %p129
      // Predicated region
      $region9: #{tpu_custom_call.1} parent=5 // pred_check
        _
      $region10: #{tpu_custom_call.1} parent=5 // pred_check_branch
        %132 = sbr.rel (%p129) target = $region12
      $region11: #{tpu_custom_call.1} parent=5 // pred_region
        %s133 = ssub.s32 %s20, 1
        // Predicated region
        $region13: #{tpu_custom_call.1} parent=11 // pred_check
          %p134 = pneg %p67
        $region14: #{tpu_custom_call.1} parent=11 // pred_check_branch
          %136 = sbr.rel (%p134) target = $region16
        $region15: #{tpu_custom_call.1} parent=11 // pred_region
          %138 = vsyncadd [#allocation7], 0
          %s139 = sshll.u32 %s1, 4
          %s140 = int_to_ptr.hbm [resolvable:$true] %s139
          %s141 = sshll.u32 [#allocation6], 4
          %s142 = int_to_ptr.vmem [resolvable:$true] %s141
          %147 = dma.hbm_to_vmem [thread:$0]  %s140, 18432, %s142, [#allocation7], 128, 128, 8
        $region16: #{tpu_custom_call.1} parent=11 // pred_fallthru
          _
      $region12: #{tpu_custom_call.1} parent=5 // pred_fallthru
        _
      %p148 = scmp.lt.s32.totalorder %s20, 2
      // Predicated region
      $region17: #{tpu_custom_call.1} parent=5 // pred_check
        %p149 = pneg %p148
      $region18: #{tpu_custom_call.1} parent=5 // pred_check_branch
        %151 = sbr.rel (%p149) target = $region20
      $region19: #{tpu_custom_call.1} parent=5 // pred_region
        // Predicated region
        $region21: #{tpu_custom_call.1} parent=19 // pred_check
          %p152 = pneg %p40
        $region22: #{tpu_custom_call.1} parent=19 // pred_check_branch
          %154 = sbr.rel (%p152) target = $region24
        $region23: #{tpu_custom_call.1} parent=19 // pred_region
          %s155 = sand.u32 %s30, 1
          %s156 = scalar_lea.sflag [#allocation4], %s155
          %s157 = sand.u32 %s30, 1
          %s158 = smul.addr %s157, 256
          %s159 = scalar_lea.vmem [#allocation3], %s158
          %161 = vsyncadd %s156, 0
          %s162 = smul.addr %s20, 32
          %s163 = smul.addr %s162, 8
          %s164 = scalar_lea.hbm %s0, %s163
          %s165 = sshll.u32 %s164, 4
          %s166 = int_to_ptr.hbm [resolvable:$true] %s165
          %s167 = sshll.u32 %s159, 4
          %s168 = int_to_ptr.vmem [resolvable:$true] %s167
          %173 = dma.hbm_to_vmem [thread:$0]  %s166, 4096, %s168, %s156, 128, 128, 8
        $region24: #{tpu_custom_call.1} parent=19 // pred_fallthru
          _
      $region20: #{tpu_custom_call.1} parent=5 // pred_fallthru
        _
      %p174 = scmp.le.s32.totalorder 1, %s20
      %p175 = scmp.lt.s32.totalorder %s20, 3
      %p176 = pnand %p174, %p175
      %p177 = pneg %p176
      // Predicated region
      $region25: #{tpu_custom_call.1} parent=5 // pred_check
        _
      $region26: #{tpu_custom_call.1} parent=5 // pred_check_branch
        %179 = sbr.rel (%p176) target = $region28
      $region27: #{tpu_custom_call.1} parent=5 // pred_region
        %s180 = ssub.s32 %s20, 1
        %s181 = sand.u32 %s33, 1
        %s182 = scalar_lea.sflag [#allocation4], %s181
        %s183 = sand.u32 %s33, 1
        %s184 = smul.addr %s183, 256
        %s185 = scalar_lea.vmem [#allocation3], %s184
        // Predicated region
        $region29: #{tpu_custom_call.1} parent=27 // pred_check
          %p186 = pneg %p46
        $region30: #{tpu_custom_call.1} parent=27 // pred_check_branch
          %188 = sbr.rel (%p186) target = $region32
        $region31: #{tpu_custom_call.1} parent=27 // pred_region
          %190 = dma.done %s182, 4096
        $region32: #{tpu_custom_call.1} parent=27 // pred_fallthru
          _
        // Predicated region
        $region33: #{tpu_custom_call.1} parent=27 // pred_check
          %p191 = pneg %p67
        $region34: #{tpu_custom_call.1} parent=27 // pred_check_branch
          %193 = sbr.rel (%p191) target = $region36
        $region35: #{tpu_custom_call.1} parent=27 // pred_region
          %195 = dma.done [#allocation7], 18432
        $region36: #{tpu_custom_call.1} parent=27 // pred_fallthru
          _
        %s196 = sand.u32 %s33, 1
        %s197 = scalar_lea.sflag [#allocation4], %s196
        %s198 = sand.u32 %s33, 1
        %s199 = smul.addr %s198, 256
        %s200 = scalar_lea.vmem [#allocation3], %s199
        %p201 = pneg %p46
        %p202 = pneg %p43
        %p203 = pneg %p67
        %p204 = pneg %p64
        %p205 = pneg %p93
        %p206 = pneg %p90
        %s207 = sand.u32 %s80, 1
        %s208 = scalar_lea.sflag [#allocation5], %s207
        %s209 = sand.u32 %s80, 1
        %s210 = smul.addr %s209, 256
        %s211 = scalar_lea.vmem [#allocation8], %s210
        %p212 = pneg %p119
        %p213 = pneg %p116
        %s214 = sand.u32 %s106, 1
        %s215 = scalar_lea.sflag [#allocation10], %s214
        %s216 = sand.u32 %s106, 1
        %s217 = smul.addr %s216, 2
        %s218 = scalar_lea.vmem [#allocation9], %s217
        %v219 = vld [vmem:[%s185] sm:$0xff]
        %v220 = vld [vmem:[%s185 + $0x8] sm:$0xff]
        %v221 = vld [vmem:[%s185 + $0x10] sm:$0xff]
        %v222 = vld [vmem:[%s185 + $0x18] sm:$0xff]
        %v223 = vld [vmem:[%s185 + $0x20] sm:$0xff]
        %v224 = vld [vmem:[%s185 + $0x28] sm:$0xff]
        %v225 = vld [vmem:[%s185 + $0x30] sm:$0xff]
        %v226 = vld [vmem:[%s185 + $0x38] sm:$0xff]
        %v227 = vld [vmem:[%s185 + $0x40] sm:$0xff]
        %v228 = vld [vmem:[%s185 + $0x48] sm:$0xff]
        %v229 = vld [vmem:[%s185 + $0x50] sm:$0xff]
        %v230 = vld [vmem:[%s185 + $0x58] sm:$0xff]
        %v231 = vld [vmem:[%s185 + $0x60] sm:$0xff]
        %v232 = vld [vmem:[%s185 + $0x68] sm:$0xff]
        %v233 = vld [vmem:[%s185 + $0x70] sm:$0xff]
        %v234 = vld [vmem:[%s185 + $0x78] sm:$0xff]
        %v235 = vld [vmem:[%s185 + $0x80] sm:$0xff]
        %v236 = vld [vmem:[%s185 + $0x88] sm:$0xff]
        %v237 = vld [vmem:[%s185 + $0x90] sm:$0xff]
        %v238 = vld [vmem:[%s185 + $0x98] sm:$0xff]
        %v239 = vld [vmem:[%s185 + $0xa0] sm:$0xff]
        %v240 = vld [vmem:[%s185 + $0xa8] sm:$0xff]
        %v241 = vld [vmem:[%s185 + $0xb0] sm:$0xff]
        %v242 = vld [vmem:[%s185 + $0xb8] sm:$0xff]
        %v243 = vld [vmem:[%s185 + $0xc0] sm:$0xff]
        %v244 = vld [vmem:[%s185 + $0xc8] sm:$0xff]
        %v245 = vld [vmem:[%s185 + $0xd0] sm:$0xff]
        %v246 = vld [vmem:[%s185 + $0xd8] sm:$0xff]
        %v247 = vld [vmem:[%s185 + $0xe0] sm:$0xff]
        %v248 = vld [vmem:[%s185 + $0xe8] sm:$0xff]
        %v249 = vld [vmem:[%s185 + $0xf0] sm:$0xff]
        %v250 = vld [vmem:[%s185 + $0xf8] sm:$0xff]
        %vm282 = vcmask 1040384
        %v283 = vrot.slane 0.0, 7
        %v284 = vsel %vm282, %v283, %v283
        %v285 = vrot.slane %v219, 7
        %v286 = vrot.slane %v220, 7
        %v287 = vsel %vm282, %v285, %v286
        %v288 = vrot.slane %v221, 7
        %v289 = vrot.slane %v222, 7
        %v290 = vsel %vm282, %v288, %v289
        %v291 = vrot.slane %v223, 7
        %v292 = vrot.slane %v224, 7
        %v293 = vsel %vm282, %v291, %v292
        %v294 = vrot.slane %v225, 7
        %v295 = vrot.slane %v226, 7
        %v296 = vsel %vm282, %v294, %v295
        %v297 = vrot.slane %v227, 7
        %v298 = vrot.slane %v228, 7
        %v299 = vsel %vm282, %v297, %v298
        %v300 = vrot.slane %v229, 7
        %v301 = vrot.slane %v230, 7
        %v302 = vsel %vm282, %v300, %v301
        %v303 = vrot.slane %v231, 7
        %v304 = vrot.slane %v232, 7
        %v305 = vsel %vm282, %v303, %v304
        %v306 = vrot.slane %v233, 7
        %v307 = vrot.slane %v234, 7
        %v308 = vsel %vm282, %v306, %v307
        %v309 = vrot.slane %v235, 7
        %v310 = vrot.slane %v236, 7
        %v311 = vsel %vm282, %v309, %v310
        %v312 = vrot.slane %v237, 7
        %v313 = vrot.slane %v238, 7
        %v314 = vsel %vm282, %v312, %v313
        %v315 = vrot.slane %v239, 7
        %v316 = vrot.slane %v240, 7
        %v317 = vsel %vm282, %v315, %v316
        %v318 = vrot.slane %v241, 7
        %v319 = vrot.slane %v242, 7
        %v320 = vsel %vm282, %v318, %v319
        %v321 = vrot.slane %v243, 7
        %v322 = vrot.slane %v244, 7
        %v323 = vsel %vm282, %v321, %v322
        %v324 = vrot.slane %v245, 7
        %v325 = vrot.slane %v246, 7
        %v326 = vsel %vm282, %v324, %v325
        %v327 = vrot.slane %v247, 7
        %v328 = vrot.slane %v248, 7
        %v329 = vsel %vm282, %v327, %v328
        %v362 = vsel %vm282, 0.0, %v283
        %v363 = vsel %vm282, 0.0, %v285
        %v364 = vsel %vm282, 0.0, %v288
        %v365 = vsel %vm282, 0.0, %v291
        %v366 = vsel %vm282, 0.0, %v294
        %v367 = vsel %vm282, 0.0, %v297
        %v368 = vsel %vm282, 0.0, %v300
        %v369 = vsel %vm282, 0.0, %v303
        %v370 = vsel %vm282, 0.0, %v306
        %v371 = vsel %vm282, 0.0, %v309
        %v372 = vsel %vm282, 0.0, %v312
        %v373 = vsel %vm282, 0.0, %v315
        %v374 = vsel %vm282, 0.0, %v318
        %v375 = vsel %vm282, 0.0, %v321
        %v376 = vsel %vm282, 0.0, %v324
        %v377 = vsel %vm282, 0.0, %v327
        %378 = vst [vmem:[#allocation2] sm:$0xff] %v362
        %379 = vst [vmem:[#allocation2 + $0x48] sm:$0xff] %v284
        %380 = vst [vmem:[#allocation2 + $0x90] sm:$0xff] %v363
        %381 = vst [vmem:[#allocation2 + $0xd8] sm:$0xff] %v287
        %382 = vst [vmem:[#allocation2 + $0x120] sm:$0xff] %v364
        %383 = vst [vmem:[#allocation2 + $0x168] sm:$0xff] %v290
        %384 = vst [vmem:[#allocation2 + $0x1b0] sm:$0xff] %v365
        %385 = vst [vmem:[#allocation2 + $0x1f8] sm:$0xff] %v293
        %386 = vst [vmem:[#allocation2 + $0x240] sm:$0xff] %v366
        %387 = vst [vmem:[#allocation2 + $0x288] sm:$0xff] %v296
        %388 = vst [vmem:[#allocation2 + $0x2d0] sm:$0xff] %v367
        %389 = vst [vmem:[#allocation2 + $0x318] sm:$0xff] %v299
        %390 = vst [vmem:[#allocation2 + $0x360] sm:$0xff] %v368
        %391 = vst [vmem:[#allocation2 + $0x3a8] sm:$0xff] %v302
        %392 = vst [vmem:[#allocation2 + $0x3f0] sm:$0xff] %v369
        %393 = vst [vmem:[#allocation2 + $0x438] sm:$0xff] %v305
        %394 = vst [vmem:[#allocation2 + $0x480] sm:$0xff] %v370
        %395 = vst [vmem:[#allocation2 + $0x4c8] sm:$0xff] %v308
        %396 = vst [vmem:[#allocation2 + $0x510] sm:$0xff] %v371
        %397 = vst [vmem:[#allocation2 + $0x558] sm:$0xff] %v311
        %398 = vst [vmem:[#allocation2 + $0x5a0] sm:$0xff] %v372
        %399 = vst [vmem:[#allocation2 + $0x5e8] sm:$0xff] %v314
        %400 = vst [vmem:[#allocation2 + $0x630] sm:$0xff] %v373
        %401 = vst [vmem:[#allocation2 + $0x678] sm:$0xff] %v317
        %402 = vst [vmem:[#allocation2 + $0x6c0] sm:$0xff] %v374
        %403 = vst [vmem:[#allocation2 + $0x708] sm:$0xff] %v320
        %404 = vst [vmem:[#allocation2 + $0x750] sm:$0xff] %v375
        %405 = vst [vmem:[#allocation2 + $0x798] sm:$0xff] %v323
        %406 = vst [vmem:[#allocation2 + $0x7e0] sm:$0xff] %v376
        %407 = vst [vmem:[#allocation2 + $0x828] sm:$0xff] %v326
        %408 = vst [vmem:[#allocation2 + $0x870] sm:$0xff] %v377
        %409 = vst [vmem:[#allocation2 + $0x8b8] sm:$0xff] %v329
        %410 = vst [vmem:[#allocation2 + $0x8] sm:$0xff] 0.0
        %411 = vst [vmem:[#allocation2 + $0x50] sm:$0xff] 0.0
        %412 = vst [vmem:[#allocation2 + $0x98] sm:$0xff] %v219
        %413 = vst [vmem:[#allocation2 + $0xe0] sm:$0xff] %v220
        %414 = vst [vmem:[#allocation2 + $0x128] sm:$0xff] %v221
        %415 = vst [vmem:[#allocation2 + $0x170] sm:$0xff] %v222
        %416 = vst [vmem:[#allocation2 + $0x1b8] sm:$0xff] %v223
        %417 = vst [vmem:[#allocation2 + $0x200] sm:$0xff] %v224
        %418 = vst [vmem:[#allocation2 + $0x248] sm:$0xff] %v225
        %419 = vst [vmem:[#allocation2 + $0x290] sm:$0xff] %v226
        %420 = vst [vmem:[#allocation2 + $0x2d8] sm:$0xff] %v227
        %421 = vst [vmem:[#allocation2 + $0x320] sm:$0xff] %v228
        %422 = vst [vmem:[#allocation2 + $0x368] sm:$0xff] %v229
        %423 = vst [vmem:[#allocation2 + $0x3b0] sm:$0xff] %v230
        %424 = vst [vmem:[#allocation2 + $0x3f8] sm:$0xff] %v231
        %425 = vst [vmem:[#allocation2 + $0x440] sm:$0xff] %v232
        %426 = vst [vmem:[#allocation2 + $0x488] sm:$0xff] %v233
        %427 = vst [vmem:[#allocation2 + $0x4d0] sm:$0xff] %v234
        %428 = vst [vmem:[#allocation2 + $0x518] sm:$0xff] %v235
        %429 = vst [vmem:[#allocation2 + $0x560] sm:$0xff] %v236
        %430 = vst [vmem:[#allocation2 + $0x5a8] sm:$0xff] %v237
        %431 = vst [vmem:[#allocation2 + $0x5f0] sm:$0xff] %v238
        %432 = vst [vmem:[#allocation2 + $0x638] sm:$0xff] %v239
        %433 = vst [vmem:[#allocation2 + $0x680] sm:$0xff] %v240
        %434 = vst [vmem:[#allocation2 + $0x6c8] sm:$0xff] %v241
        %435 = vst [vmem:[#allocation2 + $0x710] sm:$0xff] %v242
        %436 = vst [vmem:[#allocation2 + $0x758] sm:$0xff] %v243
        %437 = vst [vmem:[#allocation2 + $0x7a0] sm:$0xff] %v244
        %438 = vst [vmem:[#allocation2 + $0x7e8] sm:$0xff] %v245
        %439 = vst [vmem:[#allocation2 + $0x830] sm:$0xff] %v246
        %440 = vst [vmem:[#allocation2 + $0x878] sm:$0xff] %v247
        %441 = vst [vmem:[#allocation2 + $0x8c0] sm:$0xff] %v248
        %vm442 = vcmask 1046528
        %v443 = vrot.slane 0.0, 1
        %v444 = vsel %vm442, %v443, %v443
        %v445 = vrot.slane %v219, 1
        %v446 = vrot.slane %v220, 1
        %v447 = vsel %vm442, %v445, %v446
        %v448 = vrot.slane %v221, 1
        %v449 = vrot.slane %v222, 1
        %v450 = vsel %vm442, %v448, %v449
        %v451 = vrot.slane %v223, 1
        %v452 = vrot.slane %v224, 1
        %v453 = vsel %vm442, %v451, %v452
        %v454 = vrot.slane %v225, 1
        %v455 = vrot.slane %v226, 1
        %v456 = vsel %vm442, %v454, %v455
        %v457 = vrot.slane %v227, 1
        %v458 = vrot.slane %v228, 1
        %v459 = vsel %vm442, %v457, %v458
        %v460 = vrot.slane %v229, 1
        %v461 = vrot.slane %v230, 1
        %v462 = vsel %vm442, %v460, %v461
        %v463 = vrot.slane %v231, 1
        %v464 = vrot.slane %v232, 1
        %v465 = vsel %vm442, %v463, %v464
        %v466 = vrot.slane %v233, 1
        %v467 = vrot.slane %v234, 1
        %v468 = vsel %vm442, %v466, %v467
        %v469 = vrot.slane %v235, 1
        %v470 = vrot.slane %v236, 1
        %v471 = vsel %vm442, %v469, %v470
        %v472 = vrot.slane %v237, 1
        %v473 = vrot.slane %v238, 1
        %v474 = vsel %vm442, %v472, %v473
        %v475 = vrot.slane %v239, 1
        %v476 = vrot.slane %v240, 1
        %v477 = vsel %vm442, %v475, %v476
        %v478 = vrot.slane %v241, 1
        %v479 = vrot.slane %v242, 1
        %v480 = vsel %vm442, %v478, %v479
        %v481 = vrot.slane %v243, 1
        %v482 = vrot.slane %v244, 1
        %v483 = vsel %vm442, %v481, %v482
        %v484 = vrot.slane %v245, 1
        %v485 = vrot.slane %v246, 1
        %v486 = vsel %vm442, %v484, %v485
        %v487 = vrot.slane %v247, 1
        %v488 = vrot.slane %v248, 1
        %v489 = vsel %vm442, %v487, %v488
        %v522 = vsel %vm442, %v443, 0.0
        %v523 = vsel %vm442, %v446, 0.0
        %v524 = vsel %vm442, %v449, 0.0
        %v525 = vsel %vm442, %v452, 0.0
        %v526 = vsel %vm442, %v455, 0.0
        %v527 = vsel %vm442, %v458, 0.0
        %v528 = vsel %vm442, %v461, 0.0
        %v529 = vsel %vm442, %v464, 0.0
        %v530 = vsel %vm442, %v467, 0.0
        %v531 = vsel %vm442, %v470, 0.0
        %v532 = vsel %vm442, %v473, 0.0
        %v533 = vsel %vm442, %v476, 0.0
        %v534 = vsel %vm442, %v479, 0.0
        %v535 = vsel %vm442, %v482, 0.0
        %v536 = vsel %vm442, %v485, 0.0
        %v537 = vsel %vm442, %v488, 0.0
        %538 = vst [vmem:[#allocation2 + $0x10] sm:$0xff] %v444
        %539 = vst [vmem:[#allocation2 + $0x58] sm:$0xff] %v522
        %540 = vst [vmem:[#allocation2 + $0xa0] sm:$0xff] %v447
        %541 = vst [vmem:[#allocation2 + $0xe8] sm:$0xff] %v523
        %542 = vst [vmem:[#allocation2 + $0x130] sm:$0xff] %v450
        %543 = vst [vmem:[#allocation2 + $0x178] sm:$0xff] %v524
        %544 = vst [vmem:[#allocation2 + $0x1c0] sm:$0xff] %v453
        %545 = vst [vmem:[#allocation2 + $0x208] sm:$0xff] %v525
        %546 = vst [vmem:[#allocation2 + $0x250] sm:$0xff] %v456
        %547 = vst [vmem:[#allocation2 + $0x298] sm:$0xff] %v526
        %548 = vst [vmem:[#allocation2 + $0x2e0] sm:$0xff] %v459
        %549 = vst [vmem:[#allocation2 + $0x328] sm:$0xff] %v527
        %550 = vst [vmem:[#allocation2 + $0x370] sm:$0xff] %v462
        %551 = vst [vmem:[#allocation2 + $0x3b8] sm:$0xff] %v528
        %552 = vst [vmem:[#allocation2 + $0x400] sm:$0xff] %v465
        %553 = vst [vmem:[#allocation2 + $0x448] sm:$0xff] %v529
        %554 = vst [vmem:[#allocation2 + $0x490] sm:$0xff] %v468
        %555 = vst [vmem:[#allocation2 + $0x4d8] sm:$0xff] %v530
        %556 = vst [vmem:[#allocation2 + $0x520] sm:$0xff] %v471
        %557 = vst [vmem:[#allocation2 + $0x568] sm:$0xff] %v531
        %558 = vst [vmem:[#allocation2 + $0x5b0] sm:$0xff] %v474
        %559 = vst [vmem:[#allocation2 + $0x5f8] sm:$0xff] %v532
        %560 = vst [vmem:[#allocation2 + $0x640] sm:$0xff] %v477
        %561 = vst [vmem:[#allocation2 + $0x688] sm:$0xff] %v533
        %562 = vst [vmem:[#allocation2 + $0x6d0] sm:$0xff] %v480
        %563 = vst [vmem:[#allocation2 + $0x718] sm:$0xff] %v534
        %564 = vst [vmem:[#allocation2 + $0x760] sm:$0xff] %v483
        %565 = vst [vmem:[#allocation2 + $0x7a8] sm:$0xff] %v535
        %566 = vst [vmem:[#allocation2 + $0x7f0] sm:$0xff] %v486
        %567 = vst [vmem:[#allocation2 + $0x838] sm:$0xff] %v536
        %568 = vst [vmem:[#allocation2 + $0x880] sm:$0xff] %v489
        %569 = vst [vmem:[#allocation2 + $0x8c8] sm:$0xff] %v537
        %v572 = vrot.slane %v249, 7
        %v573 = vrot.slane %v250, 7
        %v574 = vsel %vm282, %v572, %v573
        %v577 = vsel %vm282, 0.0, %v572
        %578 = vst [vmem:[#allocation2 + $0x18] sm:$0xff] %v363
        %579 = vst [vmem:[#allocation2 + $0x60] sm:$0xff] %v287
        %580 = vst [vmem:[#allocation2 + $0xa8] sm:$0xff] %v364
        %581 = vst [vmem:[#allocation2 + $0xf0] sm:$0xff] %v290
        %582 = vst [vmem:[#allocation2 + $0x138] sm:$0xff] %v365
        %583 = vst [vmem:[#allocation2 + $0x180] sm:$0xff] %v293
        %584 = vst [vmem:[#allocation2 + $0x1c8] sm:$0xff] %v366
        %585 = vst [vmem:[#allocation2 + $0x210] sm:$0xff] %v296
        %586 = vst [vmem:[#allocation2 + $0x258] sm:$0xff] %v367
        %587 = vst [vmem:[#allocation2 + $0x2a0] sm:$0xff] %v299
        %588 = vst [vmem:[#allocation2 + $0x2e8] sm:$0xff] %v368
        %589 = vst [vmem:[#allocation2 + $0x330] sm:$0xff] %v302
        %590 = vst [vmem:[#allocation2 + $0x378] sm:$0xff] %v369
        %591 = vst [vmem:[#allocation2 + $0x3c0] sm:$0xff] %v305
        %592 = vst [vmem:[#allocation2 + $0x408] sm:$0xff] %v370
        %593 = vst [vmem:[#allocation2 + $0x450] sm:$0xff] %v308
        %594 = vst [vmem:[#allocation2 + $0x498] sm:$0xff] %v371
        %595 = vst [vmem:[#allocation2 + $0x4e0] sm:$0xff] %v311
        %596 = vst [vmem:[#allocation2 + $0x528] sm:$0xff] %v372
        %597 = vst [vmem:[#allocation2 + $0x570] sm:$0xff] %v314
        %598 = vst [vmem:[#allocation2 + $0x5b8] sm:$0xff] %v373
        %599 = vst [vmem:[#allocation2 + $0x600] sm:$0xff] %v317
        %600 = vst [vmem:[#allocation2 + $0x648] sm:$0xff] %v374
        %601 = vst [vmem:[#allocation2 + $0x690] sm:$0xff] %v320
        %602 = vst [vmem:[#allocation2 + $0x6d8] sm:$0xff] %v375
        %603 = vst [vmem:[#allocation2 + $0x720] sm:$0xff] %v323
        %604 = vst [vmem:[#allocation2 + $0x768] sm:$0xff] %v376
        %605 = vst [vmem:[#allocation2 + $0x7b0] sm:$0xff] %v326
        %606 = vst [vmem:[#allocation2 + $0x7f8] sm:$0xff] %v377
        %607 = vst [vmem:[#allocation2 + $0x840] sm:$0xff] %v329
        %608 = vst [vmem:[#allocation2 + $0x888] sm:$0xff] %v577
        %609 = vst [vmem:[#allocation2 + $0x8d0] sm:$0xff] %v574
        %610 = vst [vmem:[#allocation2 + $0x20] sm:$0xff] %v219
        %611 = vst [vmem:[#allocation2 + $0x68] sm:$0xff] %v220
        %612 = vst [vmem:[#allocation2 + $0xb0] sm:$0xff] %v221
        %613 = vst [vmem:[#allocation2 + $0xf8] sm:$0xff] %v222
        %614 = vst [vmem:[#allocation2 + $0x140] sm:$0xff] %v223
        %615 = vst [vmem:[#allocation2 + $0x188] sm:$0xff] %v224
        %616 = vst [vmem:[#allocation2 + $0x1d0] sm:$0xff] %v225
        %617 = vst [vmem:[#allocation2 + $0x218] sm:$0xff] %v226
        %618 = vst [vmem:[#allocation2 + $0x260] sm:$0xff] %v227
        %619 = vst [vmem:[#allocation2 + $0x2a8] sm:$0xff] %v228
        %620 = vst [vmem:[#allocation2 + $0x2f0] sm:$0xff] %v229
        %621 = vst [vmem:[#allocation2 + $0x338] sm:$0xff] %v230
        %622 = vst [vmem:[#allocation2 + $0x380] sm:$0xff] %v231
        %623 = vst [vmem:[#allocation2 + $0x3c8] sm:$0xff] %v232
        %624 = vst [vmem:[#allocation2 + $0x410] sm:$0xff] %v233
        %625 = vst [vmem:[#allocation2 + $0x458] sm:$0xff] %v234
        %626 = vst [vmem:[#allocation2 + $0x4a0] sm:$0xff] %v235
        %627 = vst [vmem:[#allocation2 + $0x4e8] sm:$0xff] %v236
        %628 = vst [vmem:[#allocation2 + $0x530] sm:$0xff] %v237
        %629 = vst [vmem:[#allocation2 + $0x578] sm:$0xff] %v238
        %630 = vst [vmem:[#allocation2 + $0x5c0] sm:$0xff] %v239
        %631 = vst [vmem:[#allocation2 + $0x608] sm:$0xff] %v240
        %632 = vst [vmem:[#allocation2 + $0x650] sm:$0xff] %v241
        %633 = vst [vmem:[#allocation2 + $0x698] sm:$0xff] %v242
        %634 = vst [vmem:[#allocation2 + $0x6e0] sm:$0xff] %v243
        %635 = vst [vmem:[#allocation2 + $0x728] sm:$0xff] %v244
        %636 = vst [vmem:[#allocation2 + $0x770] sm:$0xff] %v245
        %637 = vst [vmem:[#allocation2 + $0x7b8] sm:$0xff] %v246
        %638 = vst [vmem:[#allocation2 + $0x800] sm:$0xff] %v247
        %639 = vst [vmem:[#allocation2 + $0x848] sm:$0xff] %v248
        %640 = vst [vmem:[#allocation2 + $0x890] sm:$0xff] %v249
        %641 = vst [vmem:[#allocation2 + $0x8d8] sm:$0xff] %v250
        %v642 = vrot.slane %v249, 1
        %v643 = vrot.slane %v250, 1
        %v644 = vsel %vm442, %v642, %v643
        %v647 = vsel %vm442, %v643, 0.0
        %648 = vst [vmem:[#allocation2 + $0x28] sm:$0xff] %v447
        %649 = vst [vmem:[#allocation2 + $0x70] sm:$0xff] %v523
        %650 = vst [vmem:[#allocation2 + $0xb8] sm:$0xff] %v450
        %651 = vst [vmem:[#allocation2 + $0x100] sm:$0xff] %v524
        %652 = vst [vmem:[#allocation2 + $0x148] sm:$0xff] %v453
        %653 = vst [vmem:[#allocation2 + $0x190] sm:$0xff] %v525
        %654 = vst [vmem:[#allocation2 + $0x1d8] sm:$0xff] %v456
        %655 = vst [vmem:[#allocation2 + $0x220] sm:$0xff] %v526
        %656 = vst [vmem:[#allocation2 + $0x268] sm:$0xff] %v459
        %657 = vst [vmem:[#allocation2 + $0x2b0] sm:$0xff] %v527
        %658 = vst [vmem:[#allocation2 + $0x2f8] sm:$0xff] %v462
        %659 = vst [vmem:[#allocation2 + $0x340] sm:$0xff] %v528
        %660 = vst [vmem:[#allocation2 + $0x388] sm:$0xff] %v465
        %661 = vst [vmem:[#allocation2 + $0x3d0] sm:$0xff] %v529
        %662 = vst [vmem:[#allocation2 + $0x418] sm:$0xff] %v468
        %663 = vst [vmem:[#allocation2 + $0x460] sm:$0xff] %v530
        %664 = vst [vmem:[#allocation2 + $0x4a8] sm:$0xff] %v471
        %665 = vst [vmem:[#allocation2 + $0x4f0] sm:$0xff] %v531
        %666 = vst [vmem:[#allocation2 + $0x538] sm:$0xff] %v474
        %667 = vst [vmem:[#allocation2 + $0x580] sm:$0xff] %v532
        %668 = vst [vmem:[#allocation2 + $0x5c8] sm:$0xff] %v477
        %669 = vst [vmem:[#allocation2 + $0x610] sm:$0xff] %v533
        %670 = vst [vmem:[#allocation2 + $0x658] sm:$0xff] %v480
        %671 = vst [vmem:[#allocation2 + $0x6a0] sm:$0xff] %v534
        %672 = vst [vmem:[#allocation2 + $0x6e8] sm:$0xff] %v483
        %673 = vst [vmem:[#allocation2 + $0x730] sm:$0xff] %v535
        %674 = vst [vmem:[#allocation2 + $0x778] sm:$0xff] %v486
        %675 = vst [vmem:[#allocation2 + $0x7c0] sm:$0xff] %v536
        %676 = vst [vmem:[#allocation2 + $0x808] sm:$0xff] %v489
        %677 = vst [vmem:[#allocation2 + $0x850] sm:$0xff] %v537
        %678 = vst [vmem:[#allocation2 + $0x898] sm:$0xff] %v644
        %679 = vst [vmem:[#allocation2 + $0x8e0] sm:$0xff] %v647
        %680 = vst [vmem:[#allocation2 + $0x30] sm:$0xff] %v364
        %681 = vst [vmem:[#allocation2 + $0x78] sm:$0xff] %v290
        %682 = vst [vmem:[#allocation2 + $0xc0] sm:$0xff] %v365
        %683 = vst [vmem:[#allocation2 + $0x108] sm:$0xff] %v293
        %684 = vst [vmem:[#allocation2 + $0x150] sm:$0xff] %v366
        %685 = vst [vmem:[#allocation2 + $0x198] sm:$0xff] %v296
        %686 = vst [vmem:[#allocation2 + $0x1e0] sm:$0xff] %v367
        %687 = vst [vmem:[#allocation2 + $0x228] sm:$0xff] %v299
        %688 = vst [vmem:[#allocation2 + $0x270] sm:$0xff] %v368
        %689 = vst [vmem:[#allocation2 + $0x2b8] sm:$0xff] %v302
        %690 = vst [vmem:[#allocation2 + $0x300] sm:$0xff] %v369
        %691 = vst [vmem:[#allocation2 + $0x348] sm:$0xff] %v305
        %692 = vst [vmem:[#allocation2 + $0x390] sm:$0xff] %v370
        %693 = vst [vmem:[#allocation2 + $0x3d8] sm:$0xff] %v308
        %694 = vst [vmem:[#allocation2 + $0x420] sm:$0xff] %v371
        %695 = vst [vmem:[#allocation2 + $0x468] sm:$0xff] %v311
        %696 = vst [vmem:[#allocation2 + $0x4b0] sm:$0xff] %v372
        %697 = vst [vmem:[#allocation2 + $0x4f8] sm:$0xff] %v314
        %698 = vst [vmem:[#allocation2 + $0x540] sm:$0xff] %v373
        %699 = vst [vmem:[#allocation2 + $0x588] sm:$0xff] %v317
        %700 = vst [vmem:[#allocation2 + $0x5d0] sm:$0xff] %v374
        %701 = vst [vmem:[#allocation2 + $0x618] sm:$0xff] %v320
        %702 = vst [vmem:[#allocation2 + $0x660] sm:$0xff] %v375
        %703 = vst [vmem:[#allocation2 + $0x6a8] sm:$0xff] %v323
        %704 = vst [vmem:[#allocation2 + $0x6f0] sm:$0xff] %v376
        %705 = vst [vmem:[#allocation2 + $0x738] sm:$0xff] %v326
        %706 = vst [vmem:[#allocation2 + $0x780] sm:$0xff] %v377
        %707 = vst [vmem:[#allocation2 + $0x7c8] sm:$0xff] %v329
        %708 = vst [vmem:[#allocation2 + $0x810] sm:$0xff] %v577
        %709 = vst [vmem:[#allocation2 + $0x858] sm:$0xff] %v574
        %710 = vst [vmem:[#allocation2 + $0x8a0] sm:$0xff] %v362
        %711 = vst [vmem:[#allocation2 + $0x8e8] sm:$0xff] %v284
        %712 = vst [vmem:[#allocation2 + $0x38] sm:$0xff] %v221
        %713 = vst [vmem:[#allocation2 + $0x80] sm:$0xff] %v222
        %714 = vst [vmem:[#allocation2 + $0xc8] sm:$0xff] %v223
        %715 = vst [vmem:[#allocation2 + $0x110] sm:$0xff] %v224
        %716 = vst [vmem:[#allocation2 + $0x158] sm:$0xff] %v225
        %717 = vst [vmem:[#allocation2 + $0x1a0] sm:$0xff] %v226
        %718 = vst [vmem:[#allocation2 + $0x1e8] sm:$0xff] %v227
        %719 = vst [vmem:[#allocation2 + $0x230] sm:$0xff] %v228
        %720 = vst [vmem:[#allocation2 + $0x278] sm:$0xff] %v229
        %721 = vst [vmem:[#allocation2 + $0x2c0] sm:$0xff] %v230
        %722 = vst [vmem:[#allocation2 + $0x308] sm:$0xff] %v231
        %723 = vst [vmem:[#allocation2 + $0x350] sm:$0xff] %v232
        %724 = vst [vmem:[#allocation2 + $0x398] sm:$0xff] %v233
        %725 = vst [vmem:[#allocation2 + $0x3e0] sm:$0xff] %v234
        %726 = vst [vmem:[#allocation2 + $0x428] sm:$0xff] %v235
        %727 = vst [vmem:[#allocation2 + $0x470] sm:$0xff] %v236
        %728 = vst [vmem:[#allocation2 + $0x4b8] sm:$0xff] %v237
        %729 = vst [vmem:[#allocation2 + $0x500] sm:$0xff] %v238
        %730 = vst [vmem:[#allocation2 + $0x548] sm:$0xff] %v239
        %731 = vst [vmem:[#allocation2 + $0x590] sm:$0xff] %v240
        %732 = vst [vmem:[#allocation2 + $0x5d8] sm:$0xff] %v241
        %733 = vst [vmem:[#allocation2 + $0x620] sm:$0xff] %v242
        %734 = vst [vmem:[#allocation2 + $0x668] sm:$0xff] %v243
        %735 = vst [vmem:[#allocation2 + $0x6b0] sm:$0xff] %v244
        %736 = vst [vmem:[#allocation2 + $0x6f8] sm:$0xff] %v245
        %737 = vst [vmem:[#allocation2 + $0x740] sm:$0xff] %v246
        %738 = vst [vmem:[#allocation2 + $0x788] sm:$0xff] %v247
        %739 = vst [vmem:[#allocation2 + $0x7d0] sm:$0xff] %v248
        %740 = vst [vmem:[#allocation2 + $0x818] sm:$0xff] %v249
        %741 = vst [vmem:[#allocation2 + $0x860] sm:$0xff] %v250
        %742 = vst [vmem:[#allocation2 + $0x8a8] sm:$0xff] 0.0
        %743 = vst [vmem:[#allocation2 + $0x8f0] sm:$0xff] 0.0
        %744 = vst [vmem:[#allocation2 + $0x40] sm:$0xff] %v450
        %745 = vst [vmem:[#allocation2 + $0x88] sm:$0xff] %v524
        %746 = vst [vmem:[#allocation2 + $0xd0] sm:$0xff] %v453
        %747 = vst [vmem:[#allocation2 + $0x118] sm:$0xff] %v525
        %748 = vst [vmem:[#allocation2 + $0x160] sm:$0xff] %v456
        %749 = vst [vmem:[#allocation2 + $0x1a8] sm:$0xff] %v526
        %750 = vst [vmem:[#allocation2 + $0x1f0] sm:$0xff] %v459
        %751 = vst [vmem:[#allocation2 + $0x238] sm:$0xff] %v527
        %752 = vst [vmem:[#allocation2 + $0x280] sm:$0xff] %v462
        %753 = vst [vmem:[#allocation2 + $0x2c8] sm:$0xff] %v528
        %754 = vst [vmem:[#allocation2 + $0x310] sm:$0xff] %v465
        %755 = vst [vmem:[#allocation2 + $0x358] sm:$0xff] %v529
        %756 = vst [vmem:[#allocation2 + $0x3a0] sm:$0xff] %v468
        %757 = vst [vmem:[#allocation2 + $0x3e8] sm:$0xff] %v530
        %758 = vst [vmem:[#allocation2 + $0x430] sm:$0xff] %v471
        %759 = vst [vmem:[#allocation2 + $0x478] sm:$0xff] %v531
        %760 = vst [vmem:[#allocation2 + $0x4c0] sm:$0xff] %v474
        %761 = vst [vmem:[#allocation2 + $0x508] sm:$0xff] %v532
        %762 = vst [vmem:[#allocation2 + $0x550] sm:$0xff] %v477
        %763 = vst [vmem:[#allocation2 + $0x598] sm:$0xff] %v533
        %764 = vst [vmem:[#allocation2 + $0x5e0] sm:$0xff] %v480
        %765 = vst [vmem:[#allocation2 + $0x628] sm:$0xff] %v534
        %766 = vst [vmem:[#allocation2 + $0x670] sm:$0xff] %v483
        %767 = vst [vmem:[#allocation2 + $0x6b8] sm:$0xff] %v535
        %768 = vst [vmem:[#allocation2 + $0x700] sm:$0xff] %v486
        %769 = vst [vmem:[#allocation2 + $0x748] sm:$0xff] %v536
        %770 = vst [vmem:[#allocation2 + $0x790] sm:$0xff] %v489
        %771 = vst [vmem:[#allocation2 + $0x7d8] sm:$0xff] %v537
        %772 = vst [vmem:[#allocation2 + $0x820] sm:$0xff] %v644
        %773 = vst [vmem:[#allocation2 + $0x868] sm:$0xff] %v647
        %774 = vst [vmem:[#allocation2 + $0x8b0] sm:$0xff] %v444
        %775 = vst [vmem:[#allocation2 + $0x8f8] sm:$0xff] %v522
        %v776 = vld [vmem:[#allocation2] sm:$0xff]
        %v777 = vld [vmem:[#allocation2 + $0x8] sm:$0xff]
        %v778 = vld [vmem:[#allocation2 + $0x10] sm:$0xff]
        %v779 = vld [vmem:[#allocation2 + $0x18] sm:$0xff]
        %v780 = vld [vmem:[#allocation2 + $0x20] sm:$0xff]
        %v781 = vld [vmem:[#allocation2 + $0x28] sm:$0xff]
        %v782 = vld [vmem:[#allocation2 + $0x30] sm:$0xff]
        %v783 = vld [vmem:[#allocation2 + $0x38] sm:$0xff]
        %v784 = vld [vmem:[#allocation2 + $0x40] sm:$0xff]
        %v785 = vld [vmem:[#allocation2 + $0x48] sm:$0xff]
        %v786 = vld [vmem:[#allocation2 + $0x50] sm:$0xff]
        %v787 = vld [vmem:[#allocation2 + $0x58] sm:$0xff]
        %v788 = vld [vmem:[#allocation2 + $0x60] sm:$0xff]
        %v789 = vld [vmem:[#allocation2 + $0x68] sm:$0xff]
        %v790 = vld [vmem:[#allocation2 + $0x70] sm:$0xff]
        %v791 = vld [vmem:[#allocation2 + $0x78] sm:$0xff]
        %v792 = vld [vmem:[#allocation2 + $0x80] sm:$0xff]
        %v793 = vld [vmem:[#allocation2 + $0x88] sm:$0xff]
        %v794 = vld [vmem:[#allocation2 + $0x90] sm:$0xff]
        %v795 = vld [vmem:[#allocation2 + $0x98] sm:$0xff]
        %v796 = vld [vmem:[#allocation2 + $0xa0] sm:$0xff]
        %v797 = vld [vmem:[#allocation2 + $0xa8] sm:$0xff]
        %v798 = vld [vmem:[#allocation2 + $0xb0] sm:$0xff]
        %v799 = vld [vmem:[#allocation2 + $0xb8] sm:$0xff]
        %v800 = vld [vmem:[#allocation2 + $0xc0] sm:$0xff]
        %v801 = vld [vmem:[#allocation2 + $0xc8] sm:$0xff]
        %v802 = vld [vmem:[#allocation2 + $0xd0] sm:$0xff]
        %v803 = vld [vmem:[#allocation2 + $0xd8] sm:$0xff]
        %v804 = vld [vmem:[#allocation2 + $0xe0] sm:$0xff]
        %v805 = vld [vmem:[#allocation2 + $0xe8] sm:$0xff]
        %v806 = vld [vmem:[#allocation2 + $0xf0] sm:$0xff]
        %v807 = vld [vmem:[#allocation2 + $0xf8] sm:$0xff]
        %v808 = vld [vmem:[#allocation2 + $0x100] sm:$0xff]
        %v809 = vld [vmem:[#allocation2 + $0x108] sm:$0xff]
        %v810 = vld [vmem:[#allocation2 + $0x110] sm:$0xff]
        %v811 = vld [vmem:[#allocation2 + $0x118] sm:$0xff]
        %v812 = vld [vmem:[#allocation2 + $0x120] sm:$0xff]
        %v813 = vld [vmem:[#allocation2 + $0x128] sm:$0xff]
        %v814 = vld [vmem:[#allocation2 + $0x130] sm:$0xff]
        %v815 = vld [vmem:[#allocation2 + $0x138] sm:$0xff]
        %v816 = vld [vmem:[#allocation2 + $0x140] sm:$0xff]
        %v817 = vld [vmem:[#allocation2 + $0x148] sm:$0xff]
        %v818 = vld [vmem:[#allocation2 + $0x150] sm:$0xff]
        %v819 = vld [vmem:[#allocation2 + $0x158] sm:$0xff]
        %v820 = vld [vmem:[#allocation2 + $0x160] sm:$0xff]
        %v821 = vld [vmem:[#allocation2 + $0x168] sm:$0xff]
        %v822 = vld [vmem:[#allocation2 + $0x170] sm:$0xff]
        %v823 = vld [vmem:[#allocation2 + $0x178] sm:$0xff]
        %v824 = vld [vmem:[#allocation2 + $0x180] sm:$0xff]
        %v825 = vld [vmem:[#allocation2 + $0x188] sm:$0xff]
        %v826 = vld [vmem:[#allocation2 + $0x190] sm:$0xff]
        %v827 = vld [vmem:[#allocation2 + $0x198] sm:$0xff]
        %v828 = vld [vmem:[#allocation2 + $0x1a0] sm:$0xff]
        %v829 = vld [vmem:[#allocation2 + $0x1a8] sm:$0xff]
        %v830 = vld [vmem:[#allocation2 + $0x1b0] sm:$0xff]
        %v831 = vld [vmem:[#allocation2 + $0x1b8] sm:$0xff]
        %v832 = vld [vmem:[#allocation2 + $0x1c0] sm:$0xff]
        %v833 = vld [vmem:[#allocation2 + $0x1c8] sm:$0xff]
        %v834 = vld [vmem:[#allocation2 + $0x1d0] sm:$0xff]
        %v835 = vld [vmem:[#allocation2 + $0x1d8] sm:$0xff]
        %v836 = vld [vmem:[#allocation2 + $0x1e0] sm:$0xff]
        %v837 = vld [vmem:[#allocation2 + $0x1e8] sm:$0xff]
        %v838 = vld [vmem:[#allocation2 + $0x1f0] sm:$0xff]
        %v839 = vld [vmem:[#allocation2 + $0x1f8] sm:$0xff]
        %v840 = vld [vmem:[#allocation2 + $0x200] sm:$0xff]
        %v841 = vld [vmem:[#allocation2 + $0x208] sm:$0xff]
        %v842 = vld [vmem:[#allocation2 + $0x210] sm:$0xff]
        %v843 = vld [vmem:[#allocation2 + $0x218] sm:$0xff]
        %v844 = vld [vmem:[#allocation2 + $0x220] sm:$0xff]
        %v845 = vld [vmem:[#allocation2 + $0x228] sm:$0xff]
        %v846 = vld [vmem:[#allocation2 + $0x230] sm:$0xff]
        %v847 = vld [vmem:[#allocation2 + $0x238] sm:$0xff]
        %v848 = vld [vmem:[#allocation2 + $0x240] sm:$0xff]
        %v849 = vld [vmem:[#allocation2 + $0x248] sm:$0xff]
        %v850 = vld [vmem:[#allocation2 + $0x250] sm:$0xff]
        %v851 = vld [vmem:[#allocation2 + $0x258] sm:$0xff]
        %v852 = vld [vmem:[#allocation2 + $0x260] sm:$0xff]
        %v853 = vld [vmem:[#allocation2 + $0x268] sm:$0xff]
        %v854 = vld [vmem:[#allocation2 + $0x270] sm:$0xff]
        %v855 = vld [vmem:[#allocation2 + $0x278] sm:$0xff]
        %v856 = vld [vmem:[#allocation2 + $0x280] sm:$0xff]
        %v857 = vld [vmem:[#allocation2 + $0x288] sm:$0xff]
        %v858 = vld [vmem:[#allocation2 + $0x290] sm:$0xff]
        %v859 = vld [vmem:[#allocation2 + $0x298] sm:$0xff]
        %v860 = vld [vmem:[#allocation2 + $0x2a0] sm:$0xff]
        %v861 = vld [vmem:[#allocation2 + $0x2a8] sm:$0xff]
        %v862 = vld [vmem:[#allocation2 + $0x2b0] sm:$0xff]
        %v863 = vld [vmem:[#allocation2 + $0x2b8] sm:$0xff]
        %v864 = vld [vmem:[#allocation2 + $0x2c0] sm:$0xff]
        %v865 = vld [vmem:[#allocation2 + $0x2c8] sm:$0xff]
        %v866 = vld [vmem:[#allocation2 + $0x2d0] sm:$0xff]
        %v867 = vld [vmem:[#allocation2 + $0x2d8] sm:$0xff]
        %v868 = vld [vmem:[#allocation2 + $0x2e0] sm:$0xff]
        %v869 = vld [vmem:[#allocation2 + $0x2e8] sm:$0xff]
        %v870 = vld [vmem:[#allocation2 + $0x2f0] sm:$0xff]
        %v871 = vld [vmem:[#allocation2 + $0x2f8] sm:$0xff]
        %v872 = vld [vmem:[#allocation2 + $0x300] sm:$0xff]
        %v873 = vld [vmem:[#allocation2 + $0x308] sm:$0xff]
        %v874 = vld [vmem:[#allocation2 + $0x310] sm:$0xff]
        %v875 = vld [vmem:[#allocation2 + $0x318] sm:$0xff]
        %v876 = vld [vmem:[#allocation2 + $0x320] sm:$0xff]
        %v877 = vld [vmem:[#allocation2 + $0x328] sm:$0xff]
        %v878 = vld [vmem:[#allocation2 + $0x330] sm:$0xff]
        %v879 = vld [vmem:[#allocation2 + $0x338] sm:$0xff]
        %v880 = vld [vmem:[#allocation2 + $0x340] sm:$0xff]
        %v881 = vld [vmem:[#allocation2 + $0x348] sm:$0xff]
        %v882 = vld [vmem:[#allocation2 + $0x350] sm:$0xff]
        %v883 = vld [vmem:[#allocation2 + $0x358] sm:$0xff]
        %v884 = vld [vmem:[#allocation2 + $0x360] sm:$0xff]
        %v885 = vld [vmem:[#allocation2 + $0x368] sm:$0xff]
        %v886 = vld [vmem:[#allocation2 + $0x370] sm:$0xff]
        %v887 = vld [vmem:[#allocation2 + $0x378] sm:$0xff]
        %v888 = vld [vmem:[#allocation2 + $0x380] sm:$0xff]
        %v889 = vld [vmem:[#allocation2 + $0x388] sm:$0xff]
        %v890 = vld [vmem:[#allocation2 + $0x390] sm:$0xff]
        %v891 = vld [vmem:[#allocation2 + $0x398] sm:$0xff]
        %v892 = vld [vmem:[#allocation2 + $0x3a0] sm:$0xff]
        %v893 = vld [vmem:[#allocation2 + $0x3a8] sm:$0xff]
        %v894 = vld [vmem:[#allocation2 + $0x3b0] sm:$0xff]
        %v895 = vld [vmem:[#allocation2 + $0x3b8] sm:$0xff]
        %v896 = vld [vmem:[#allocation2 + $0x3c0] sm:$0xff]
        %v897 = vld [vmem:[#allocation2 + $0x3c8] sm:$0xff]
        %v898 = vld [vmem:[#allocation2 + $0x3d0] sm:$0xff]
        %v899 = vld [vmem:[#allocation2 + $0x3d8] sm:$0xff]
        %v900 = vld [vmem:[#allocation2 + $0x3e0] sm:$0xff]
        %v901 = vld [vmem:[#allocation2 + $0x3e8] sm:$0xff]
        %v902 = vld [vmem:[#allocation2 + $0x3f0] sm:$0xff]
        %v903 = vld [vmem:[#allocation2 + $0x3f8] sm:$0xff]
        %v904 = vld [vmem:[#allocation2 + $0x400] sm:$0xff]
        %v905 = vld [vmem:[#allocation2 + $0x408] sm:$0xff]
        %v906 = vld [vmem:[#allocation2 + $0x410] sm:$0xff]
        %v907 = vld [vmem:[#allocation2 + $0x418] sm:$0xff]
        %v908 = vld [vmem:[#allocation2 + $0x420] sm:$0xff]
        %v909 = vld [vmem:[#allocation2 + $0x428] sm:$0xff]
        %v910 = vld [vmem:[#allocation2 + $0x430] sm:$0xff]
        %v911 = vld [vmem:[#allocation2 + $0x438] sm:$0xff]
        %v912 = vld [vmem:[#allocation2 + $0x440] sm:$0xff]
        %v913 = vld [vmem:[#allocation2 + $0x448] sm:$0xff]
        %v914 = vld [vmem:[#allocation2 + $0x450] sm:$0xff]
        %v915 = vld [vmem:[#allocation2 + $0x458] sm:$0xff]
        %v916 = vld [vmem:[#allocation2 + $0x460] sm:$0xff]
        %v917 = vld [vmem:[#allocation2 + $0x468] sm:$0xff]
        %v918 = vld [vmem:[#allocation2 + $0x470] sm:$0xff]
        %v919 = vld [vmem:[#allocation2 + $0x478] sm:$0xff]
        %v920 = vld [vmem:[#allocation2 + $0x480] sm:$0xff]
        %v921 = vld [vmem:[#allocation2 + $0x488] sm:$0xff]
        %v922 = vld [vmem:[#allocation2 + $0x490] sm:$0xff]
        %v923 = vld [vmem:[#allocation2 + $0x498] sm:$0xff]
        %v924 = vld [vmem:[#allocation2 + $0x4a0] sm:$0xff]
        %v925 = vld [vmem:[#allocation2 + $0x4a8] sm:$0xff]
        %v926 = vld [vmem:[#allocation2 + $0x4b0] sm:$0xff]
        %v927 = vld [vmem:[#allocation2 + $0x4b8] sm:$0xff]
        %v928 = vld [vmem:[#allocation2 + $0x4c0] sm:$0xff]
        %v929 = vld [vmem:[#allocation2 + $0x4c8] sm:$0xff]
        %v930 = vld [vmem:[#allocation2 + $0x4d0] sm:$0xff]
        %v931 = vld [vmem:[#allocation2 + $0x4d8] sm:$0xff]
        %v932 = vld [vmem:[#allocation2 + $0x4e0] sm:$0xff]
        %v933 = vld [vmem:[#allocation2 + $0x4e8] sm:$0xff]
        %v934 = vld [vmem:[#allocation2 + $0x4f0] sm:$0xff]
        %v935 = vld [vmem:[#allocation2 + $0x4f8] sm:$0xff]
        %v936 = vld [vmem:[#allocation2 + $0x500] sm:$0xff]
        %v937 = vld [vmem:[#allocation2 + $0x508] sm:$0xff]
        %v938 = vld [vmem:[#allocation2 + $0x510] sm:$0xff]
        %v939 = vld [vmem:[#allocation2 + $0x518] sm:$0xff]
        %v940 = vld [vmem:[#allocation2 + $0x520] sm:$0xff]
        %v941 = vld [vmem:[#allocation2 + $0x528] sm:$0xff]
        %v942 = vld [vmem:[#allocation2 + $0x530] sm:$0xff]
        %v943 = vld [vmem:[#allocation2 + $0x538] sm:$0xff]
        %v944 = vld [vmem:[#allocation2 + $0x540] sm:$0xff]
        %v945 = vld [vmem:[#allocation2 + $0x548] sm:$0xff]
        %v946 = vld [vmem:[#allocation2 + $0x550] sm:$0xff]
        %v947 = vld [vmem:[#allocation2 + $0x558] sm:$0xff]
        %v948 = vld [vmem:[#allocation2 + $0x560] sm:$0xff]
        %v949 = vld [vmem:[#allocation2 + $0x568] sm:$0xff]
        %v950 = vld [vmem:[#allocation2 + $0x570] sm:$0xff]
        %v951 = vld [vmem:[#allocation2 + $0x578] sm:$0xff]
        %v952 = vld [vmem:[#allocation2 + $0x580] sm:$0xff]
        %v953 = vld [vmem:[#allocation2 + $0x588] sm:$0xff]
        %v954 = vld [vmem:[#allocation2 + $0x590] sm:$0xff]
        %v955 = vld [vmem:[#allocation2 + $0x598] sm:$0xff]
        %v956 = vld [vmem:[#allocation2 + $0x5a0] sm:$0xff]
        %v957 = vld [vmem:[#allocation2 + $0x5a8] sm:$0xff]
        %v958 = vld [vmem:[#allocation2 + $0x5b0] sm:$0xff]
        %v959 = vld [vmem:[#allocation2 + $0x5b8] sm:$0xff]
        %v960 = vld [vmem:[#allocation2 + $0x5c0] sm:$0xff]
        %v961 = vld [vmem:[#allocation2 + $0x5c8] sm:$0xff]
        %v962 = vld [vmem:[#allocation2 + $0x5d0] sm:$0xff]
        %v963 = vld [vmem:[#allocation2 + $0x5d8] sm:$0xff]
        %v964 = vld [vmem:[#allocation2 + $0x5e0] sm:$0xff]
        %v965 = vld [vmem:[#allocation2 + $0x5e8] sm:$0xff]
        %v966 = vld [vmem:[#allocation2 + $0x5f0] sm:$0xff]
        %v967 = vld [vmem:[#allocation2 + $0x5f8] sm:$0xff]
        %v968 = vld [vmem:[#allocation2 + $0x600] sm:$0xff]
        %v969 = vld [vmem:[#allocation2 + $0x608] sm:$0xff]
        %v970 = vld [vmem:[#allocation2 + $0x610] sm:$0xff]
        %v971 = vld [vmem:[#allocation2 + $0x618] sm:$0xff]
        %v972 = vld [vmem:[#allocation2 + $0x620] sm:$0xff]
        %v973 = vld [vmem:[#allocation2 + $0x628] sm:$0xff]
        %v974 = vld [vmem:[#allocation2 + $0x630] sm:$0xff]
        %v975 = vld [vmem:[#allocation2 + $0x638] sm:$0xff]
        %v976 = vld [vmem:[#allocation2 + $0x640] sm:$0xff]
        %v977 = vld [vmem:[#allocation2 + $0x648] sm:$0xff]
        %v978 = vld [vmem:[#allocation2 + $0x650] sm:$0xff]
        %v979 = vld [vmem:[#allocation2 + $0x658] sm:$0xff]
        %v980 = vld [vmem:[#allocation2 + $0x660] sm:$0xff]
        %v981 = vld [vmem:[#allocation2 + $0x668] sm:$0xff]
        %v982 = vld [vmem:[#allocation2 + $0x670] sm:$0xff]
        %v983 = vld [vmem:[#allocation2 + $0x678] sm:$0xff]
        %v984 = vld [vmem:[#allocation2 + $0x680] sm:$0xff]
        %v985 = vld [vmem:[#allocation2 + $0x688] sm:$0xff]
        %v986 = vld [vmem:[#allocation2 + $0x690] sm:$0xff]
        %v987 = vld [vmem:[#allocation2 + $0x698] sm:$0xff]
        %v988 = vld [vmem:[#allocation2 + $0x6a0] sm:$0xff]
        %v989 = vld [vmem:[#allocation2 + $0x6a8] sm:$0xff]
        %v990 = vld [vmem:[#allocation2 + $0x6b0] sm:$0xff]
        %v991 = vld [vmem:[#allocation2 + $0x6b8] sm:$0xff]
        %v992 = vld [vmem:[#allocation2 + $0x6c0] sm:$0xff]
        %v993 = vld [vmem:[#allocation2 + $0x6c8] sm:$0xff]
        %v994 = vld [vmem:[#allocation2 + $0x6d0] sm:$0xff]
        %v995 = vld [vmem:[#allocation2 + $0x6d8] sm:$0xff]
        %v996 = vld [vmem:[#allocation2 + $0x6e0] sm:$0xff]
        %v997 = vld [vmem:[#allocation2 + $0x6e8] sm:$0xff]
        %v998 = vld [vmem:[#allocation2 + $0x6f0] sm:$0xff]
        %v999 = vld [vmem:[#allocation2 + $0x6f8] sm:$0xff]
        %v1000 = vld [vmem:[#allocation2 + $0x700] sm:$0xff]
        %v1001 = vld [vmem:[#allocation2 + $0x708] sm:$0xff]
        %v1002 = vld [vmem:[#allocation2 + $0x710] sm:$0xff]
        %v1003 = vld [vmem:[#allocation2 + $0x718] sm:$0xff]
        %v1004 = vld [vmem:[#allocation2 + $0x720] sm:$0xff]
        %v1005 = vld [vmem:[#allocation2 + $0x728] sm:$0xff]
        %v1006 = vld [vmem:[#allocation2 + $0x730] sm:$0xff]
        %v1007 = vld [vmem:[#allocation2 + $0x738] sm:$0xff]
        %v1008 = vld [vmem:[#allocation2 + $0x740] sm:$0xff]
        %v1009 = vld [vmem:[#allocation2 + $0x748] sm:$0xff]
        %v1010 = vld [vmem:[#allocation2 + $0x750] sm:$0xff]
        %v1011 = vld [vmem:[#allocation2 + $0x758] sm:$0xff]
        %v1012 = vld [vmem:[#allocation2 + $0x760] sm:$0xff]
        %v1013 = vld [vmem:[#allocation2 + $0x768] sm:$0xff]
        %v1014 = vld [vmem:[#allocation2 + $0x770] sm:$0xff]
        %v1015 = vld [vmem:[#allocation2 + $0x778] sm:$0xff]
        %v1016 = vld [vmem:[#allocation2 + $0x780] sm:$0xff]
        %v1017 = vld [vmem:[#allocation2 + $0x788] sm:$0xff]
        %v1018 = vld [vmem:[#allocation2 + $0x790] sm:$0xff]
        %v1019 = vld [vmem:[#allocation2 + $0x798] sm:$0xff]
        %v1020 = vld [vmem:[#allocation2 + $0x7a0] sm:$0xff]
        %v1021 = vld [vmem:[#allocation2 + $0x7a8] sm:$0xff]
        %v1022 = vld [vmem:[#allocation2 + $0x7b0] sm:$0xff]
        %v1023 = vld [vmem:[#allocation2 + $0x7b8] sm:$0xff]
        %v1024 = vld [vmem:[#allocation2 + $0x7c0] sm:$0xff]
        %v1025 = vld [vmem:[#allocation2 + $0x7c8] sm:$0xff]
        %v1026 = vld [vmem:[#allocation2 + $0x7d0] sm:$0xff]
        %v1027 = vld [vmem:[#allocation2 + $0x7d8] sm:$0xff]
        %v1028 = vld [vmem:[#allocation2 + $0x7e0] sm:$0xff]
        %v1029 = vld [vmem:[#allocation2 + $0x7e8] sm:$0xff]
        %v1030 = vld [vmem:[#allocation2 + $0x7f0] sm:$0xff]
        %v1031 = vld [vmem:[#allocation2 + $0x7f8] sm:$0xff]
        %v1032 = vld [vmem:[#allocation2 + $0x800] sm:$0xff]
        %v1033 = vld [vmem:[#allocation2 + $0x808] sm:$0xff]
        %v1034 = vld [vmem:[#allocation2 + $0x810] sm:$0xff]
        %v1035 = vld [vmem:[#allocation2 + $0x818] sm:$0xff]
        %v1036 = vld [vmem:[#allocation2 + $0x820] sm:$0xff]
        %v1037 = vld [vmem:[#allocation2 + $0x828] sm:$0xff]
        %v1038 = vld [vmem:[#allocation2 + $0x830] sm:$0xff]
        %v1039 = vld [vmem:[#allocation2 + $0x838] sm:$0xff]
        %v1040 = vld [vmem:[#allocation2 + $0x840] sm:$0xff]
        %v1041 = vld [vmem:[#allocation2 + $0x848] sm:$0xff]
        %v1042 = vld [vmem:[#allocation2 + $0x850] sm:$0xff]
        %v1043 = vld [vmem:[#allocation2 + $0x858] sm:$0xff]
        %v1044 = vld [vmem:[#allocation2 + $0x860] sm:$0xff]
        %v1045 = vld [vmem:[#allocation2 + $0x868] sm:$0xff]
        %v1046 = vld [vmem:[#allocation2 + $0x870] sm:$0xff]
        %v1047 = vld [vmem:[#allocation2 + $0x878] sm:$0xff]
        %v1048 = vld [vmem:[#allocation2 + $0x880] sm:$0xff]
        %v1049 = vld [vmem:[#allocation2 + $0x888] sm:$0xff]
        %v1050 = vld [vmem:[#allocation2 + $0x890] sm:$0xff]
        %v1051 = vld [vmem:[#allocation2 + $0x898] sm:$0xff]
        %v1052 = vld [vmem:[#allocation2 + $0x8a0] sm:$0xff]
        %v1053 = vld [vmem:[#allocation2 + $0x8a8] sm:$0xff]
        %v1054 = vld [vmem:[#allocation2 + $0x8b0] sm:$0xff]
        %v1055 = vld [vmem:[#allocation2 + $0x8b8] sm:$0xff]
        %v1056 = vld [vmem:[#allocation2 + $0x8c0] sm:$0xff]
        %v1057 = vld [vmem:[#allocation2 + $0x8c8] sm:$0xff]
        %v1058 = vld [vmem:[#allocation2 + $0x8d0] sm:$0xff]
        %v1059 = vld [vmem:[#allocation2 + $0x8d8] sm:$0xff]
        %v1060 = vld [vmem:[#allocation2 + $0x8e0] sm:$0xff]
        %v1061 = vld [vmem:[#allocation2 + $0x8e8] sm:$0xff]
        %v1062 = vld [vmem:[#allocation2 + $0x8f0] sm:$0xff]
        %v1063 = vld [vmem:[#allocation2 + $0x8f8] sm:$0xff]
        %v1064 = vld [vmem:[#allocation6] sm:$0xff]
        %v1065 = vld [vmem:[#allocation6 + $0x8] sm:$0xff]
        %v1066 = vld [vmem:[#allocation6 + $0x10] sm:$0xff]
        %v1067 = vld [vmem:[#allocation6 + $0x18] sm:$0xff]
        %v1068 = vld [vmem:[#allocation6 + $0x20] sm:$0xff]
        %v1069 = vld [vmem:[#allocation6 + $0x28] sm:$0xff]
        %v1070 = vld [vmem:[#allocation6 + $0x30] sm:$0xff]
        %v1071 = vld [vmem:[#allocation6 + $0x38] sm:$0xff]
        %v1072 = vld [vmem:[#allocation6 + $0x40] sm:$0xff]
        %v1073 = vld [vmem:[#allocation6 + $0x48] sm:$0xff]
        %v1074 = vld [vmem:[#allocation6 + $0x50] sm:$0xff]
        %v1075 = vld [vmem:[#allocation6 + $0x58] sm:$0xff]
        %v1076 = vld [vmem:[#allocation6 + $0x60] sm:$0xff]
        %v1077 = vld [vmem:[#allocation6 + $0x68] sm:$0xff]
        %v1078 = vld [vmem:[#allocation6 + $0x70] sm:$0xff]
        %v1079 = vld [vmem:[#allocation6 + $0x78] sm:$0xff]
        %v1080 = vld [vmem:[#allocation6 + $0x80] sm:$0xff]
        %v1081 = vld [vmem:[#allocation6 + $0x88] sm:$0xff]
        %v1082 = vld [vmem:[#allocation6 + $0x90] sm:$0xff]
        %v1083 = vld [vmem:[#allocation6 + $0x98] sm:$0xff]
        %v1084 = vld [vmem:[#allocation6 + $0xa0] sm:$0xff]
        %v1085 = vld [vmem:[#allocation6 + $0xa8] sm:$0xff]
        %v1086 = vld [vmem:[#allocation6 + $0xb0] sm:$0xff]
        %v1087 = vld [vmem:[#allocation6 + $0xb8] sm:$0xff]
        %v1088 = vld [vmem:[#allocation6 + $0xc0] sm:$0xff]
        %v1089 = vld [vmem:[#allocation6 + $0xc8] sm:$0xff]
        %v1090 = vld [vmem:[#allocation6 + $0xd0] sm:$0xff]
        %v1091 = vld [vmem:[#allocation6 + $0xd8] sm:$0xff]
        %v1092 = vld [vmem:[#allocation6 + $0xe0] sm:$0xff]
        %v1093 = vld [vmem:[#allocation6 + $0xe8] sm:$0xff]
        %v1094 = vld [vmem:[#allocation6 + $0xf0] sm:$0xff]
        %v1095 = vld [vmem:[#allocation6 + $0xf8] sm:$0xff]
        %v1096 = vld [vmem:[#allocation6 + $0x100] sm:$0xff]
        %v1097 = vld [vmem:[#allocation6 + $0x108] sm:$0xff]
        %v1098 = vld [vmem:[#allocation6 + $0x110] sm:$0xff]
        %v1099 = vld [vmem:[#allocation6 + $0x118] sm:$0xff]
        %v1100 = vld [vmem:[#allocation6 + $0x120] sm:$0xff]
        %v1101 = vld [vmem:[#allocation6 + $0x128] sm:$0xff]
        %v1102 = vld [vmem:[#allocation6 + $0x130] sm:$0xff]
        %v1103 = vld [vmem:[#allocation6 + $0x138] sm:$0xff]
        %v1104 = vld [vmem:[#allocation6 + $0x140] sm:$0xff]
        %v1105 = vld [vmem:[#allocation6 + $0x148] sm:$0xff]
        %v1106 = vld [vmem:[#allocation6 + $0x150] sm:$0xff]
        %v1107 = vld [vmem:[#allocation6 + $0x158] sm:$0xff]
        %v1108 = vld [vmem:[#allocation6 + $0x160] sm:$0xff]
        %v1109 = vld [vmem:[#allocation6 + $0x168] sm:$0xff]
        %v1110 = vld [vmem:[#allocation6 + $0x170] sm:$0xff]
        %v1111 = vld [vmem:[#allocation6 + $0x178] sm:$0xff]
        %v1112 = vld [vmem:[#allocation6 + $0x180] sm:$0xff]
        %v1113 = vld [vmem:[#allocation6 + $0x188] sm:$0xff]
        %v1114 = vld [vmem:[#allocation6 + $0x190] sm:$0xff]
        %v1115 = vld [vmem:[#allocation6 + $0x198] sm:$0xff]
        %v1116 = vld [vmem:[#allocation6 + $0x1a0] sm:$0xff]
        %v1117 = vld [vmem:[#allocation6 + $0x1a8] sm:$0xff]
        %v1118 = vld [vmem:[#allocation6 + $0x1b0] sm:$0xff]
        %v1119 = vld [vmem:[#allocation6 + $0x1b8] sm:$0xff]
        %v1120 = vld [vmem:[#allocation6 + $0x1c0] sm:$0xff]
        %v1121 = vld [vmem:[#allocation6 + $0x1c8] sm:$0xff]
        %v1122 = vld [vmem:[#allocation6 + $0x1d0] sm:$0xff]
        %v1123 = vld [vmem:[#allocation6 + $0x1d8] sm:$0xff]
        %v1124 = vld [vmem:[#allocation6 + $0x1e0] sm:$0xff]
        %v1125 = vld [vmem:[#allocation6 + $0x1e8] sm:$0xff]
        %v1126 = vld [vmem:[#allocation6 + $0x1f0] sm:$0xff]
        %v1127 = vld [vmem:[#allocation6 + $0x1f8] sm:$0xff]
        %v1128 = vld [vmem:[#allocation6 + $0x200] sm:$0xff]
        %v1129 = vld [vmem:[#allocation6 + $0x208] sm:$0xff]
        %v1130 = vld [vmem:[#allocation6 + $0x210] sm:$0xff]
        %v1131 = vld [vmem:[#allocation6 + $0x218] sm:$0xff]
        %v1132 = vld [vmem:[#allocation6 + $0x220] sm:$0xff]
        %v1133 = vld [vmem:[#allocation6 + $0x228] sm:$0xff]
        %v1134 = vld [vmem:[#allocation6 + $0x230] sm:$0xff]
        %v1135 = vld [vmem:[#allocation6 + $0x238] sm:$0xff]
        %v1136 = vld [vmem:[#allocation6 + $0x240] sm:$0xff]
        %v1137 = vld [vmem:[#allocation6 + $0x248] sm:$0xff]
        %v1138 = vld [vmem:[#allocation6 + $0x250] sm:$0xff]
        %v1139 = vld [vmem:[#allocation6 + $0x258] sm:$0xff]
        %v1140 = vld [vmem:[#allocation6 + $0x260] sm:$0xff]
        %v1141 = vld [vmem:[#allocation6 + $0x268] sm:$0xff]
        %v1142 = vld [vmem:[#allocation6 + $0x270] sm:$0xff]
        %v1143 = vld [vmem:[#allocation6 + $0x278] sm:$0xff]
        %v1144 = vld [vmem:[#allocation6 + $0x280] sm:$0xff]
        %v1145 = vld [vmem:[#allocation6 + $0x288] sm:$0xff]
        %v1146 = vld [vmem:[#allocation6 + $0x290] sm:$0xff]
        %v1147 = vld [vmem:[#allocation6 + $0x298] sm:$0xff]
        %v1148 = vld [vmem:[#allocation6 + $0x2a0] sm:$0xff]
        %v1149 = vld [vmem:[#allocation6 + $0x2a8] sm:$0xff]
        %v1150 = vld [vmem:[#allocation6 + $0x2b0] sm:$0xff]
        %v1151 = vld [vmem:[#allocation6 + $0x2b8] sm:$0xff]
        %v1152 = vld [vmem:[#allocation6 + $0x2c0] sm:$0xff]
        %v1153 = vld [vmem:[#allocation6 + $0x2c8] sm:$0xff]
        %v1154 = vld [vmem:[#allocation6 + $0x2d0] sm:$0xff]
        %v1155 = vld [vmem:[#allocation6 + $0x2d8] sm:$0xff]
        %v1156 = vld [vmem:[#allocation6 + $0x2e0] sm:$0xff]
        %v1157 = vld [vmem:[#allocation6 + $0x2e8] sm:$0xff]
        %v1158 = vld [vmem:[#allocation6 + $0x2f0] sm:$0xff]
        %v1159 = vld [vmem:[#allocation6 + $0x2f8] sm:$0xff]
        %v1160 = vld [vmem:[#allocation6 + $0x300] sm:$0xff]
        %v1161 = vld [vmem:[#allocation6 + $0x308] sm:$0xff]
        %v1162 = vld [vmem:[#allocation6 + $0x310] sm:$0xff]
        %v1163 = vld [vmem:[#allocation6 + $0x318] sm:$0xff]
        %v1164 = vld [vmem:[#allocation6 + $0x320] sm:$0xff]
        %v1165 = vld [vmem:[#allocation6 + $0x328] sm:$0xff]
        %v1166 = vld [vmem:[#allocation6 + $0x330] sm:$0xff]
        %v1167 = vld [vmem:[#allocation6 + $0x338] sm:$0xff]
        %v1168 = vld [vmem:[#allocation6 + $0x340] sm:$0xff]
        %v1169 = vld [vmem:[#allocation6 + $0x348] sm:$0xff]
        %v1170 = vld [vmem:[#allocation6 + $0x350] sm:$0xff]
        %v1171 = vld [vmem:[#allocation6 + $0x358] sm:$0xff]
        %v1172 = vld [vmem:[#allocation6 + $0x360] sm:$0xff]
        %v1173 = vld [vmem:[#allocation6 + $0x368] sm:$0xff]
        %v1174 = vld [vmem:[#allocation6 + $0x370] sm:$0xff]
        %v1175 = vld [vmem:[#allocation6 + $0x378] sm:$0xff]
        %v1176 = vld [vmem:[#allocation6 + $0x380] sm:$0xff]
        %v1177 = vld [vmem:[#allocation6 + $0x388] sm:$0xff]
        %v1178 = vld [vmem:[#allocation6 + $0x390] sm:$0xff]
        %v1179 = vld [vmem:[#allocation6 + $0x398] sm:$0xff]
        %v1180 = vld [vmem:[#allocation6 + $0x3a0] sm:$0xff]
        %v1181 = vld [vmem:[#allocation6 + $0x3a8] sm:$0xff]
        %v1182 = vld [vmem:[#allocation6 + $0x3b0] sm:$0xff]
        %v1183 = vld [vmem:[#allocation6 + $0x3b8] sm:$0xff]
        %v1184 = vld [vmem:[#allocation6 + $0x3c0] sm:$0xff]
        %v1185 = vld [vmem:[#allocation6 + $0x3c8] sm:$0xff]
        %v1186 = vld [vmem:[#allocation6 + $0x3d0] sm:$0xff]
        %v1187 = vld [vmem:[#allocation6 + $0x3d8] sm:$0xff]
        %v1188 = vld [vmem:[#allocation6 + $0x3e0] sm:$0xff]
        %v1189 = vld [vmem:[#allocation6 + $0x3e8] sm:$0xff]
        %v1190 = vld [vmem:[#allocation6 + $0x3f0] sm:$0xff]
        %v1191 = vld [vmem:[#allocation6 + $0x3f8] sm:$0xff]
        %v1192 = vld [vmem:[#allocation6 + $0x400] sm:$0xff]
        %v1193 = vld [vmem:[#allocation6 + $0x408] sm:$0xff]
        %v1194 = vld [vmem:[#allocation6 + $0x410] sm:$0xff]
        %v1195 = vld [vmem:[#allocation6 + $0x418] sm:$0xff]
        %v1196 = vld [vmem:[#allocation6 + $0x420] sm:$0xff]
        %v1197 = vld [vmem:[#allocation6 + $0x428] sm:$0xff]
        %v1198 = vld [vmem:[#allocation6 + $0x430] sm:$0xff]
        %v1199 = vld [vmem:[#allocation6 + $0x438] sm:$0xff]
        %v1200 = vld [vmem:[#allocation6 + $0x440] sm:$0xff]
        %v1201 = vld [vmem:[#allocation6 + $0x448] sm:$0xff]
        %v1202 = vld [vmem:[#allocation6 + $0x450] sm:$0xff]
        %v1203 = vld [vmem:[#allocation6 + $0x458] sm:$0xff]
        %v1204 = vld [vmem:[#allocation6 + $0x460] sm:$0xff]
        %v1205 = vld [vmem:[#allocation6 + $0x468] sm:$0xff]
        %v1206 = vld [vmem:[#allocation6 + $0x470] sm:$0xff]
        %v1207 = vld [vmem:[#allocation6 + $0x478] sm:$0xff]
        %1208 = vmatpush.msra.mxu0 %v1079
        %1209 = vmatpush.msra.mxu0 %v1078
        %1210 = vmatpush.msra.mxu0 %v1077
        %1211 = vmatpush.msra.mxu0 %v1076
        %1212 = vmatpush.msra.mxu0 %v1075
        %1213 = vmatpush.msra.mxu0 %v1074
        %1214 = vmatpush.msra.mxu0 %v1073
        %1215 = vmatpush.msra.mxu0 %v1072
        %1216 = vmatpush.msra.mxu0 %v1071
        %1217 = vmatpush.msra.mxu0 %v1070
        %1218 = vmatpush.msra.mxu0 %v1069
        %1219 = vmatpush.msra.mxu0 %v1068
        %1220 = vmatpush.msra.mxu0 %v1067
        %1221 = vmatpush.msra.mxu0 %v1066
        %1222 = vmatpush.msra.mxu0 %v1065
        %1223 = vmatpush.msra.mxu0 %v1064
        %1224 = vmatmul.f32.gmra.mxu0 %v776
        %v1225 = vpop.f32.mrf.mxu0
        %v1226 = vadd.f32 0.0, %v1225
        %1227 = vmatmul.f32.gmra.mxu0 %v785
        %v1228 = vpop.f32.mrf.mxu0
        %v1229 = vadd.f32 0.0, %v1228
        %1230 = vmatmul.f32.gmra.mxu0 %v794
        %v1231 = vpop.f32.mrf.mxu0
        %v1232 = vadd.f32 0.0, %v1231
        %1233 = vmatmul.f32.gmra.mxu0 %v803
        %v1234 = vpop.f32.mrf.mxu0
        %v1235 = vadd.f32 0.0, %v1234
        %1236 = vmatmul.f32.gmra.mxu0 %v812
        %v1237 = vpop.f32.mrf.mxu0
        %v1238 = vadd.f32 0.0, %v1237
        %1239 = vmatmul.f32.gmra.mxu0 %v821
        %v1240 = vpop.f32.mrf.mxu0
        %v1241 = vadd.f32 0.0, %v1240
        %1242 = vmatmul.f32.gmra.mxu0 %v830
        %v1243 = vpop.f32.mrf.mxu0
        %v1244 = vadd.f32 0.0, %v1243
        %1245 = vmatmul.f32.gmra.mxu0 %v839
        %v1246 = vpop.f32.mrf.mxu0
        %v1247 = vadd.f32 0.0, %v1246
        %1248 = vmatmul.f32.gmra.mxu0 %v848
        %v1249 = vpop.f32.mrf.mxu0
        %v1250 = vadd.f32 0.0, %v1249
        %1251 = vmatmul.f32.gmra.mxu0 %v857
        %v1252 = vpop.f32.mrf.mxu0
        %v1253 = vadd.f32 0.0, %v1252
        %1254 = vmatmul.f32.gmra.mxu0 %v866
        %v1255 = vpop.f32.mrf.mxu0
        %v1256 = vadd.f32 0.0, %v1255
        %1257 = vmatmul.f32.gmra.mxu0 %v875
        %v1258 = vpop.f32.mrf.mxu0
        %v1259 = vadd.f32 0.0, %v1258
        %1260 = vmatmul.f32.gmra.mxu0 %v884
        %v1261 = vpop.f32.mrf.mxu0
        %v1262 = vadd.f32 0.0, %v1261
        %1263 = vmatmul.f32.gmra.mxu0 %v893
        %v1264 = vpop.f32.mrf.mxu0
        %v1265 = vadd.f32 0.0, %v1264
        %1266 = vmatmul.f32.gmra.mxu0 %v902
        %v1267 = vpop.f32.mrf.mxu0
        %v1268 = vadd.f32 0.0, %v1267
        %1269 = vmatmul.f32.gmra.mxu0 %v911
        %v1270 = vpop.f32.mrf.mxu0
        %v1271 = vadd.f32 0.0, %v1270
        %1272 = vmatmul.f32.gmra.mxu0 %v920
        %v1273 = vpop.f32.mrf.mxu0
        %v1274 = vadd.f32 0.0, %v1273
        %1275 = vmatmul.f32.gmra.mxu0 %v929
        %v1276 = vpop.f32.mrf.mxu0
        %v1277 = vadd.f32 0.0, %v1276
        %1278 = vmatmul.f32.gmra.mxu0 %v938
        %v1279 = vpop.f32.mrf.mxu0
        %v1280 = vadd.f32 0.0, %v1279
        %1281 = vmatmul.f32.gmra.mxu0 %v947
        %v1282 = vpop.f32.mrf.mxu0
        %v1283 = vadd.f32 0.0, %v1282
        %1284 = vmatmul.f32.gmra.mxu0 %v956
        %v1285 = vpop.f32.mrf.mxu0
        %v1286 = vadd.f32 0.0, %v1285
        %1287 = vmatmul.f32.gmra.mxu0 %v965
        %v1288 = vpop.f32.mrf.mxu0
        %v1289 = vadd.f32 0.0, %v1288
        %1290 = vmatmul.f32.gmra.mxu0 %v974
        %v1291 = vpop.f32.mrf.mxu0
        %v1292 = vadd.f32 0.0, %v1291
        %1293 = vmatmul.f32.gmra.mxu0 %v983
        %v1294 = vpop.f32.mrf.mxu0
        %v1295 = vadd.f32 0.0, %v1294
        %1296 = vmatmul.f32.gmra.mxu0 %v992
        %v1297 = vpop.f32.mrf.mxu0
        %v1298 = vadd.f32 0.0, %v1297
        %1299 = vmatmul.f32.gmra.mxu0 %v1001
        %v1300 = vpop.f32.mrf.mxu0
        %v1301 = vadd.f32 0.0, %v1300
        %1302 = vmatmul.f32.gmra.mxu0 %v1010
        %v1303 = vpop.f32.mrf.mxu0
        %v1304 = vadd.f32 0.0, %v1303
        %1305 = vmatmul.f32.gmra.mxu0 %v1019
        %v1306 = vpop.f32.mrf.mxu0
        %v1307 = vadd.f32 0.0, %v1306
        %1308 = vmatmul.f32.gmra.mxu0 %v1028
        %v1309 = vpop.f32.mrf.mxu0
        %v1310 = vadd.f32 0.0, %v1309
        %1311 = vmatmul.f32.gmra.mxu0 %v1037
        %v1312 = vpop.f32.mrf.mxu0
        %v1313 = vadd.f32 0.0, %v1312
        %1314 = vmatmul.f32.gmra.mxu0 %v1046
        %v1315 = vpop.f32.mrf.mxu0
        %v1316 = vadd.f32 0.0, %v1315
        %1317 = vmatmul.f32.gmra.mxu0 %v1055
        %v1318 = vpop.f32.mrf.mxu0
        %v1319 = vadd.f32 0.0, %v1318
        %1320 = vdwg.mxu0
        %1321 = vmatpush.msra.mxu0 %v1095
        %1322 = vmatpush.msra.mxu0 %v1094
        %1323 = vmatpush.msra.mxu0 %v1093
        %1324 = vmatpush.msra.mxu0 %v1092
        %1325 = vmatpush.msra.mxu0 %v1091
        %1326 = vmatpush.msra.mxu0 %v1090
        %1327 = vmatpush.msra.mxu0 %v1089
        %1328 = vmatpush.msra.mxu0 %v1088
        %1329 = vmatpush.msra.mxu0 %v1087
        %1330 = vmatpush.msra.mxu0 %v1086
        %1331 = vmatpush.msra.mxu0 %v1085
        %1332 = vmatpush.msra.mxu0 %v1084
        %1333 = vmatpush.msra.mxu0 %v1083
        %1334 = vmatpush.msra.mxu0 %v1082
        %1335 = vmatpush.msra.mxu0 %v1081
        %1336 = vmatpush.msra.mxu0 %v1080
        %1337 = vmatmul.f32.gmra.mxu0 %v777
        %v1338 = vpop.f32.mrf.mxu0
        %v1339 = vadd.f32 %v1226, %v1338
        %1340 = vmatmul.f32.gmra.mxu0 %v786
        %v1341 = vpop.f32.mrf.mxu0
        %v1342 = vadd.f32 %v1229, %v1341
        %1343 = vmatmul.f32.gmra.mxu0 %v795
        %v1344 = vpop.f32.mrf.mxu0
        %v1345 = vadd.f32 %v1232, %v1344
        %1346 = vmatmul.f32.gmra.mxu0 %v804
        %v1347 = vpop.f32.mrf.mxu0
        %v1348 = vadd.f32 %v1235, %v1347
        %1349 = vmatmul.f32.gmra.mxu0 %v813
        %v1350 = vpop.f32.mrf.mxu0
        %v1351 = vadd.f32 %v1238, %v1350
        %1352 = vmatmul.f32.gmra.mxu0 %v822
        %v1353 = vpop.f32.mrf.mxu0
        %v1354 = vadd.f32 %v1241, %v1353
        %1355 = vmatmul.f32.gmra.mxu0 %v831
        %v1356 = vpop.f32.mrf.mxu0
        %v1357 = vadd.f32 %v1244, %v1356
        %1358 = vmatmul.f32.gmra.mxu0 %v840
        %v1359 = vpop.f32.mrf.mxu0
        %v1360 = vadd.f32 %v1247, %v1359
        %1361 = vmatmul.f32.gmra.mxu0 %v849
        %v1362 = vpop.f32.mrf.mxu0
        %v1363 = vadd.f32 %v1250, %v1362
        %1364 = vmatmul.f32.gmra.mxu0 %v858
        %v1365 = vpop.f32.mrf.mxu0
        %v1366 = vadd.f32 %v1253, %v1365
        %1367 = vmatmul.f32.gmra.mxu0 %v867
        %v1368 = vpop.f32.mrf.mxu0
        %v1369 = vadd.f32 %v1256, %v1368
        %1370 = vmatmul.f32.gmra.mxu0 %v876
        %v1371 = vpop.f32.mrf.mxu0
        %v1372 = vadd.f32 %v1259, %v1371
        %1373 = vmatmul.f32.gmra.mxu0 %v885
        %v1374 = vpop.f32.mrf.mxu0
        %v1375 = vadd.f32 %v1262, %v1374
        %1376 = vmatmul.f32.gmra.mxu0 %v894
        %v1377 = vpop.f32.mrf.mxu0
        %v1378 = vadd.f32 %v1265, %v1377
        %1379 = vmatmul.f32.gmra.mxu0 %v903
        %v1380 = vpop.f32.mrf.mxu0
        %v1381 = vadd.f32 %v1268, %v1380
        %1382 = vmatmul.f32.gmra.mxu0 %v912
        %v1383 = vpop.f32.mrf.mxu0
        %v1384 = vadd.f32 %v1271, %v1383
        %1385 = vmatmul.f32.gmra.mxu0 %v921
        %v1386 = vpop.f32.mrf.mxu0
        %v1387 = vadd.f32 %v1274, %v1386
        %1388 = vmatmul.f32.gmra.mxu0 %v930
        %v1389 = vpop.f32.mrf.mxu0
        %v1390 = vadd.f32 %v1277, %v1389
        %1391 = vmatmul.f32.gmra.mxu0 %v939
        %v1392 = vpop.f32.mrf.mxu0
        %v1393 = vadd.f32 %v1280, %v1392
        %1394 = vmatmul.f32.gmra.mxu0 %v948
        %v1395 = vpop.f32.mrf.mxu0
        %v1396 = vadd.f32 %v1283, %v1395
        %1397 = vmatmul.f32.gmra.mxu0 %v957
        %v1398 = vpop.f32.mrf.mxu0
        %v1399 = vadd.f32 %v1286, %v1398
        %1400 = vmatmul.f32.gmra.mxu0 %v966
        %v1401 = vpop.f32.mrf.mxu0
        %v1402 = vadd.f32 %v1289, %v1401
        %1403 = vmatmul.f32.gmra.mxu0 %v975
        %v1404 = vpop.f32.mrf.mxu0
        %v1405 = vadd.f32 %v1292, %v1404
        %1406 = vmatmul.f32.gmra.mxu0 %v984
        %v1407 = vpop.f32.mrf.mxu0
        %v1408 = vadd.f32 %v1295, %v1407
        %1409 = vmatmul.f32.gmra.mxu0 %v993
        %v1410 = vpop.f32.mrf.mxu0
        %v1411 = vadd.f32 %v1298, %v1410
        %1412 = vmatmul.f32.gmra.mxu0 %v1002
        %v1413 = vpop.f32.mrf.mxu0
        %v1414 = vadd.f32 %v1301, %v1413
        %1415 = vmatmul.f32.gmra.mxu0 %v1011
        %v1416 = vpop.f32.mrf.mxu0
        %v1417 = vadd.f32 %v1304, %v1416
        %1418 = vmatmul.f32.gmra.mxu0 %v1020
        %v1419 = vpop.f32.mrf.mxu0
        %v1420 = vadd.f32 %v1307, %v1419
        %1421 = vmatmul.f32.gmra.mxu0 %v1029
        %v1422 = vpop.f32.mrf.mxu0
        %v1423 = vadd.f32 %v1310, %v1422
        %1424 = vmatmul.f32.gmra.mxu0 %v1038
        %v1425 = vpop.f32.mrf.mxu0
        %v1426 = vadd.f32 %v1313, %v1425
        %1427 = vmatmul.f32.gmra.mxu0 %v1047
        %v1428 = vpop.f32.mrf.mxu0
        %v1429 = vadd.f32 %v1316, %v1428
        %1430 = vmatmul.f32.gmra.mxu0 %v1056
        %v1431 = vpop.f32.mrf.mxu0
        %v1432 = vadd.f32 %v1319, %v1431
        %1433 = vdwg.mxu0
        %1434 = vmatpush.msra.mxu0 %v1111
        %1435 = vmatpush.msra.mxu0 %v1110
        %1436 = vmatpush.msra.mxu0 %v1109
        %1437 = vmatpush.msra.mxu0 %v1108
        %1438 = vmatpush.msra.mxu0 %v1107
        %1439 = vmatpush.msra.mxu0 %v1106
        %1440 = vmatpush.msra.mxu0 %v1105
        %1441 = vmatpush.msra.mxu0 %v1104
        %1442 = vmatpush.msra.mxu0 %v1103
        %1443 = vmatpush.msra.mxu0 %v1102
        %1444 = vmatpush.msra.mxu0 %v1101
        %1445 = vmatpush.msra.mxu0 %v1100
        %1446 = vmatpush.msra.mxu0 %v1099
        %1447 = vmatpush.msra.mxu0 %v1098
        %1448 = vmatpush.msra.mxu0 %v1097
        %1449 = vmatpush.msra.mxu0 %v1096
        %1450 = vmatmul.f32.gmra.mxu0 %v778
        %v1451 = vpop.f32.mrf.mxu0
        %v1452 = vadd.f32 %v1339, %v1451
        %1453 = vmatmul.f32.gmra.mxu0 %v787
        %v1454 = vpop.f32.mrf.mxu0
        %v1455 = vadd.f32 %v1342, %v1454
        %1456 = vmatmul.f32.gmra.mxu0 %v796
        %v1457 = vpop.f32.mrf.mxu0
        %v1458 = vadd.f32 %v1345, %v1457
        %1459 = vmatmul.f32.gmra.mxu0 %v805
        %v1460 = vpop.f32.mrf.mxu0
        %v1461 = vadd.f32 %v1348, %v1460
        %1462 = vmatmul.f32.gmra.mxu0 %v814
        %v1463 = vpop.f32.mrf.mxu0
        %v1464 = vadd.f32 %v1351, %v1463
        %1465 = vmatmul.f32.gmra.mxu0 %v823
        %v1466 = vpop.f32.mrf.mxu0
        %v1467 = vadd.f32 %v1354, %v1466
        %1468 = vmatmul.f32.gmra.mxu0 %v832
        %v1469 = vpop.f32.mrf.mxu0
        %v1470 = vadd.f32 %v1357, %v1469
        %1471 = vmatmul.f32.gmra.mxu0 %v841
        %v1472 = vpop.f32.mrf.mxu0
        %v1473 = vadd.f32 %v1360, %v1472
        %1474 = vmatmul.f32.gmra.mxu0 %v850
        %v1475 = vpop.f32.mrf.mxu0
        %v1476 = vadd.f32 %v1363, %v1475
        %1477 = vmatmul.f32.gmra.mxu0 %v859
        %v1478 = vpop.f32.mrf.mxu0
        %v1479 = vadd.f32 %v1366, %v1478
        %1480 = vmatmul.f32.gmra.mxu0 %v868
        %v1481 = vpop.f32.mrf.mxu0
        %v1482 = vadd.f32 %v1369, %v1481
        %1483 = vmatmul.f32.gmra.mxu0 %v877
        %v1484 = vpop.f32.mrf.mxu0
        %v1485 = vadd.f32 %v1372, %v1484
        %1486 = vmatmul.f32.gmra.mxu0 %v886
        %v1487 = vpop.f32.mrf.mxu0
        %v1488 = vadd.f32 %v1375, %v1487
        %1489 = vmatmul.f32.gmra.mxu0 %v895
        %v1490 = vpop.f32.mrf.mxu0
        %v1491 = vadd.f32 %v1378, %v1490
        %1492 = vmatmul.f32.gmra.mxu0 %v904
        %v1493 = vpop.f32.mrf.mxu0
        %v1494 = vadd.f32 %v1381, %v1493
        %1495 = vmatmul.f32.gmra.mxu0 %v913
        %v1496 = vpop.f32.mrf.mxu0
        %v1497 = vadd.f32 %v1384, %v1496
        %1498 = vmatmul.f32.gmra.mxu0 %v922
        %v1499 = vpop.f32.mrf.mxu0
        %v1500 = vadd.f32 %v1387, %v1499
        %1501 = vmatmul.f32.gmra.mxu0 %v931
        %v1502 = vpop.f32.mrf.mxu0
        %v1503 = vadd.f32 %v1390, %v1502
        %1504 = vmatmul.f32.gmra.mxu0 %v940
        %v1505 = vpop.f32.mrf.mxu0
        %v1506 = vadd.f32 %v1393, %v1505
        %1507 = vmatmul.f32.gmra.mxu0 %v949
        %v1508 = vpop.f32.mrf.mxu0
        %v1509 = vadd.f32 %v1396, %v1508
        %1510 = vmatmul.f32.gmra.mxu0 %v958
        %v1511 = vpop.f32.mrf.mxu0
        %v1512 = vadd.f32 %v1399, %v1511
        %1513 = vmatmul.f32.gmra.mxu0 %v967
        %v1514 = vpop.f32.mrf.mxu0
        %v1515 = vadd.f32 %v1402, %v1514
        %1516 = vmatmul.f32.gmra.mxu0 %v976
        %v1517 = vpop.f32.mrf.mxu0
        %v1518 = vadd.f32 %v1405, %v1517
        %1519 = vmatmul.f32.gmra.mxu0 %v985
        %v1520 = vpop.f32.mrf.mxu0
        %v1521 = vadd.f32 %v1408, %v1520
        %1522 = vmatmul.f32.gmra.mxu0 %v994
        %v1523 = vpop.f32.mrf.mxu0
        %v1524 = vadd.f32 %v1411, %v1523
        %1525 = vmatmul.f32.gmra.mxu0 %v1003
        %v1526 = vpop.f32.mrf.mxu0
        %v1527 = vadd.f32 %v1414, %v1526
        %1528 = vmatmul.f32.gmra.mxu0 %v1012
        %v1529 = vpop.f32.mrf.mxu0
        %v1530 = vadd.f32 %v1417, %v1529
        %1531 = vmatmul.f32.gmra.mxu0 %v1021
        %v1532 = vpop.f32.mrf.mxu0
        %v1533 = vadd.f32 %v1420, %v1532
        %1534 = vmatmul.f32.gmra.mxu0 %v1030
        %v1535 = vpop.f32.mrf.mxu0
        %v1536 = vadd.f32 %v1423, %v1535
        %1537 = vmatmul.f32.gmra.mxu0 %v1039
        %v1538 = vpop.f32.mrf.mxu0
        %v1539 = vadd.f32 %v1426, %v1538
        %1540 = vmatmul.f32.gmra.mxu0 %v1048
        %v1541 = vpop.f32.mrf.mxu0
        %v1542 = vadd.f32 %v1429, %v1541
        %1543 = vmatmul.f32.gmra.mxu0 %v1057
        %v1544 = vpop.f32.mrf.mxu0
        %v1545 = vadd.f32 %v1432, %v1544
        %1546 = vdwg.mxu0
        %1547 = vmatpush.msra.mxu0 %v1127
        %1548 = vmatpush.msra.mxu0 %v1126
        %1549 = vmatpush.msra.mxu0 %v1125
        %1550 = vmatpush.msra.mxu0 %v1124
        %1551 = vmatpush.msra.mxu0 %v1123
        %1552 = vmatpush.msra.mxu0 %v1122
        %1553 = vmatpush.msra.mxu0 %v1121
        %1554 = vmatpush.msra.mxu0 %v1120
        %1555 = vmatpush.msra.mxu0 %v1119
        %1556 = vmatpush.msra.mxu0 %v1118
        %1557 = vmatpush.msra.mxu0 %v1117
        %1558 = vmatpush.msra.mxu0 %v1116
        %1559 = vmatpush.msra.mxu0 %v1115
        %1560 = vmatpush.msra.mxu0 %v1114
        %1561 = vmatpush.msra.mxu0 %v1113
        %1562 = vmatpush.msra.mxu0 %v1112
        %1563 = vmatmul.f32.gmra.mxu0 %v779
        %v1564 = vpop.f32.mrf.mxu0
        %v1565 = vadd.f32 %v1452, %v1564
        %1566 = vmatmul.f32.gmra.mxu0 %v788
        %v1567 = vpop.f32.mrf.mxu0
        %v1568 = vadd.f32 %v1455, %v1567
        %1569 = vmatmul.f32.gmra.mxu0 %v797
        %v1570 = vpop.f32.mrf.mxu0
        %v1571 = vadd.f32 %v1458, %v1570
        %1572 = vmatmul.f32.gmra.mxu0 %v806
        %v1573 = vpop.f32.mrf.mxu0
        %v1574 = vadd.f32 %v1461, %v1573
        %1575 = vmatmul.f32.gmra.mxu0 %v815
        %v1576 = vpop.f32.mrf.mxu0
        %v1577 = vadd.f32 %v1464, %v1576
        %1578 = vmatmul.f32.gmra.mxu0 %v824
        %v1579 = vpop.f32.mrf.mxu0
        %v1580 = vadd.f32 %v1467, %v1579
        %1581 = vmatmul.f32.gmra.mxu0 %v833
        %v1582 = vpop.f32.mrf.mxu0
        %v1583 = vadd.f32 %v1470, %v1582
        %1584 = vmatmul.f32.gmra.mxu0 %v842
        %v1585 = vpop.f32.mrf.mxu0
        %v1586 = vadd.f32 %v1473, %v1585
        %1587 = vmatmul.f32.gmra.mxu0 %v851
        %v1588 = vpop.f32.mrf.mxu0
        %v1589 = vadd.f32 %v1476, %v1588
        %1590 = vmatmul.f32.gmra.mxu0 %v860
        %v1591 = vpop.f32.mrf.mxu0
        %v1592 = vadd.f32 %v1479, %v1591
        %1593 = vmatmul.f32.gmra.mxu0 %v869
        %v1594 = vpop.f32.mrf.mxu0
        %v1595 = vadd.f32 %v1482, %v1594
        %1596 = vmatmul.f32.gmra.mxu0 %v878
        %v1597 = vpop.f32.mrf.mxu0
        %v1598 = vadd.f32 %v1485, %v1597
        %1599 = vmatmul.f32.gmra.mxu0 %v887
        %v1600 = vpop.f32.mrf.mxu0
        %v1601 = vadd.f32 %v1488, %v1600
        %1602 = vmatmul.f32.gmra.mxu0 %v896
        %v1603 = vpop.f32.mrf.mxu0
        %v1604 = vadd.f32 %v1491, %v1603
        %1605 = vmatmul.f32.gmra.mxu0 %v905
        %v1606 = vpop.f32.mrf.mxu0
        %v1607 = vadd.f32 %v1494, %v1606
        %1608 = vmatmul.f32.gmra.mxu0 %v914
        %v1609 = vpop.f32.mrf.mxu0
        %v1610 = vadd.f32 %v1497, %v1609
        %1611 = vmatmul.f32.gmra.mxu0 %v923
        %v1612 = vpop.f32.mrf.mxu0
        %v1613 = vadd.f32 %v1500, %v1612
        %1614 = vmatmul.f32.gmra.mxu0 %v932
        %v1615 = vpop.f32.mrf.mxu0
        %v1616 = vadd.f32 %v1503, %v1615
        %1617 = vmatmul.f32.gmra.mxu0 %v941
        %v1618 = vpop.f32.mrf.mxu0
        %v1619 = vadd.f32 %v1506, %v1618
        %1620 = vmatmul.f32.gmra.mxu0 %v950
        %v1621 = vpop.f32.mrf.mxu0
        %v1622 = vadd.f32 %v1509, %v1621
        %1623 = vmatmul.f32.gmra.mxu0 %v959
        %v1624 = vpop.f32.mrf.mxu0
        %v1625 = vadd.f32 %v1512, %v1624
        %1626 = vmatmul.f32.gmra.mxu0 %v968
        %v1627 = vpop.f32.mrf.mxu0
        %v1628 = vadd.f32 %v1515, %v1627
        %1629 = vmatmul.f32.gmra.mxu0 %v977
        %v1630 = vpop.f32.mrf.mxu0
        %v1631 = vadd.f32 %v1518, %v1630
        %1632 = vmatmul.f32.gmra.mxu0 %v986
        %v1633 = vpop.f32.mrf.mxu0
        %v1634 = vadd.f32 %v1521, %v1633
        %1635 = vmatmul.f32.gmra.mxu0 %v995
        %v1636 = vpop.f32.mrf.mxu0
        %v1637 = vadd.f32 %v1524, %v1636
        %1638 = vmatmul.f32.gmra.mxu0 %v1004
        %v1639 = vpop.f32.mrf.mxu0
        %v1640 = vadd.f32 %v1527, %v1639
        %1641 = vmatmul.f32.gmra.mxu0 %v1013
        %v1642 = vpop.f32.mrf.mxu0
        %v1643 = vadd.f32 %v1530, %v1642
        %1644 = vmatmul.f32.gmra.mxu0 %v1022
        %v1645 = vpop.f32.mrf.mxu0
        %v1646 = vadd.f32 %v1533, %v1645
        %1647 = vmatmul.f32.gmra.mxu0 %v1031
        %v1648 = vpop.f32.mrf.mxu0
        %v1649 = vadd.f32 %v1536, %v1648
        %1650 = vmatmul.f32.gmra.mxu0 %v1040
        %v1651 = vpop.f32.mrf.mxu0
        %v1652 = vadd.f32 %v1539, %v1651
        %1653 = vmatmul.f32.gmra.mxu0 %v1049
        %v1654 = vpop.f32.mrf.mxu0
        %v1655 = vadd.f32 %v1542, %v1654
        %1656 = vmatmul.f32.gmra.mxu0 %v1058
        %v1657 = vpop.f32.mrf.mxu0
        %v1658 = vadd.f32 %v1545, %v1657
        %1659 = vdwg.mxu0
        %1660 = vmatpush.msra.mxu0 %v1143
        %1661 = vmatpush.msra.mxu0 %v1142
        %1662 = vmatpush.msra.mxu0 %v1141
        %1663 = vmatpush.msra.mxu0 %v1140
        %1664 = vmatpush.msra.mxu0 %v1139
        %1665 = vmatpush.msra.mxu0 %v1138
        %1666 = vmatpush.msra.mxu0 %v1137
        %1667 = vmatpush.msra.mxu0 %v1136
        %1668 = vmatpush.msra.mxu0 %v1135
        %1669 = vmatpush.msra.mxu0 %v1134
        %1670 = vmatpush.msra.mxu0 %v1133
        %1671 = vmatpush.msra.mxu0 %v1132
        %1672 = vmatpush.msra.mxu0 %v1131
        %1673 = vmatpush.msra.mxu0 %v1130
        %1674 = vmatpush.msra.mxu0 %v1129
        %1675 = vmatpush.msra.mxu0 %v1128
        %1676 = vmatmul.f32.gmra.mxu0 %v780
        %v1677 = vpop.f32.mrf.mxu0
        %v1678 = vadd.f32 %v1565, %v1677
        %1679 = vmatmul.f32.gmra.mxu0 %v789
        %v1680 = vpop.f32.mrf.mxu0
        %v1681 = vadd.f32 %v1568, %v1680
        %1682 = vmatmul.f32.gmra.mxu0 %v798
        %v1683 = vpop.f32.mrf.mxu0
        %v1684 = vadd.f32 %v1571, %v1683
        %1685 = vmatmul.f32.gmra.mxu0 %v807
        %v1686 = vpop.f32.mrf.mxu0
        %v1687 = vadd.f32 %v1574, %v1686
        %1688 = vmatmul.f32.gmra.mxu0 %v816
        %v1689 = vpop.f32.mrf.mxu0
        %v1690 = vadd.f32 %v1577, %v1689
        %1691 = vmatmul.f32.gmra.mxu0 %v825
        %v1692 = vpop.f32.mrf.mxu0
        %v1693 = vadd.f32 %v1580, %v1692
        %1694 = vmatmul.f32.gmra.mxu0 %v834
        %v1695 = vpop.f32.mrf.mxu0
        %v1696 = vadd.f32 %v1583, %v1695
        %1697 = vmatmul.f32.gmra.mxu0 %v843
        %v1698 = vpop.f32.mrf.mxu0
        %v1699 = vadd.f32 %v1586, %v1698
        %1700 = vmatmul.f32.gmra.mxu0 %v852
        %v1701 = vpop.f32.mrf.mxu0
        %v1702 = vadd.f32 %v1589, %v1701
        %1703 = vmatmul.f32.gmra.mxu0 %v861
        %v1704 = vpop.f32.mrf.mxu0
        %v1705 = vadd.f32 %v1592, %v1704
        %1706 = vmatmul.f32.gmra.mxu0 %v870
        %v1707 = vpop.f32.mrf.mxu0
        %v1708 = vadd.f32 %v1595, %v1707
        %1709 = vmatmul.f32.gmra.mxu0 %v879
        %v1710 = vpop.f32.mrf.mxu0
        %v1711 = vadd.f32 %v1598, %v1710
        %1712 = vmatmul.f32.gmra.mxu0 %v888
        %v1713 = vpop.f32.mrf.mxu0
        %v1714 = vadd.f32 %v1601, %v1713
        %1715 = vmatmul.f32.gmra.mxu0 %v897
        %v1716 = vpop.f32.mrf.mxu0
        %v1717 = vadd.f32 %v1604, %v1716
        %1718 = vmatmul.f32.gmra.mxu0 %v906
        %v1719 = vpop.f32.mrf.mxu0
        %v1720 = vadd.f32 %v1607, %v1719
        %1721 = vmatmul.f32.gmra.mxu0 %v915
        %v1722 = vpop.f32.mrf.mxu0
        %v1723 = vadd.f32 %v1610, %v1722
        %1724 = vmatmul.f32.gmra.mxu0 %v924
        %v1725 = vpop.f32.mrf.mxu0
        %v1726 = vadd.f32 %v1613, %v1725
        %1727 = vmatmul.f32.gmra.mxu0 %v933
        %v1728 = vpop.f32.mrf.mxu0
        %v1729 = vadd.f32 %v1616, %v1728
        %1730 = vmatmul.f32.gmra.mxu0 %v942
        %v1731 = vpop.f32.mrf.mxu0
        %v1732 = vadd.f32 %v1619, %v1731
        %1733 = vmatmul.f32.gmra.mxu0 %v951
        %v1734 = vpop.f32.mrf.mxu0
        %v1735 = vadd.f32 %v1622, %v1734
        %1736 = vmatmul.f32.gmra.mxu0 %v960
        %v1737 = vpop.f32.mrf.mxu0
        %v1738 = vadd.f32 %v1625, %v1737
        %1739 = vmatmul.f32.gmra.mxu0 %v969
        %v1740 = vpop.f32.mrf.mxu0
        %v1741 = vadd.f32 %v1628, %v1740
        %1742 = vmatmul.f32.gmra.mxu0 %v978
        %v1743 = vpop.f32.mrf.mxu0
        %v1744 = vadd.f32 %v1631, %v1743
        %1745 = vmatmul.f32.gmra.mxu0 %v987
        %v1746 = vpop.f32.mrf.mxu0
        %v1747 = vadd.f32 %v1634, %v1746
        %1748 = vmatmul.f32.gmra.mxu0 %v996
        %v1749 = vpop.f32.mrf.mxu0
        %v1750 = vadd.f32 %v1637, %v1749
        %1751 = vmatmul.f32.gmra.mxu0 %v1005
        %v1752 = vpop.f32.mrf.mxu0
        %v1753 = vadd.f32 %v1640, %v1752
        %1754 = vmatmul.f32.gmra.mxu0 %v1014
        %v1755 = vpop.f32.mrf.mxu0
        %v1756 = vadd.f32 %v1643, %v1755
        %1757 = vmatmul.f32.gmra.mxu0 %v1023
        %v1758 = vpop.f32.mrf.mxu0
        %v1759 = vadd.f32 %v1646, %v1758
        %1760 = vmatmul.f32.gmra.mxu0 %v1032
        %v1761 = vpop.f32.mrf.mxu0
        %v1762 = vadd.f32 %v1649, %v1761
        %1763 = vmatmul.f32.gmra.mxu0 %v1041
        %v1764 = vpop.f32.mrf.mxu0
        %v1765 = vadd.f32 %v1652, %v1764
        %1766 = vmatmul.f32.gmra.mxu0 %v1050
        %v1767 = vpop.f32.mrf.mxu0
        %v1768 = vadd.f32 %v1655, %v1767
        %1769 = vmatmul.f32.gmra.mxu0 %v1059
        %v1770 = vpop.f32.mrf.mxu0
        %v1771 = vadd.f32 %v1658, %v1770
        %1772 = vdwg.mxu0
        %1773 = vmatpush.msra.mxu0 %v1159
        %1774 = vmatpush.msra.mxu0 %v1158
        %1775 = vmatpush.msra.mxu0 %v1157
        %1776 = vmatpush.msra.mxu0 %v1156
        %1777 = vmatpush.msra.mxu0 %v1155
        %1778 = vmatpush.msra.mxu0 %v1154
        %1779 = vmatpush.msra.mxu0 %v1153
        %1780 = vmatpush.msra.mxu0 %v1152
        %1781 = vmatpush.msra.mxu0 %v1151
        %1782 = vmatpush.msra.mxu0 %v1150
        %1783 = vmatpush.msra.mxu0 %v1149
        %1784 = vmatpush.msra.mxu0 %v1148
        %1785 = vmatpush.msra.mxu0 %v1147
        %1786 = vmatpush.msra.mxu0 %v1146
        %1787 = vmatpush.msra.mxu0 %v1145
        %1788 = vmatpush.msra.mxu0 %v1144
        %1789 = vmatmul.f32.gmra.mxu0 %v781
        %v1790 = vpop.f32.mrf.mxu0
        %v1791 = vadd.f32 %v1678, %v1790
        %1792 = vmatmul.f32.gmra.mxu0 %v790
        %v1793 = vpop.f32.mrf.mxu0
        %v1794 = vadd.f32 %v1681, %v1793
        %1795 = vmatmul.f32.gmra.mxu0 %v799
        %v1796 = vpop.f32.mrf.mxu0
        %v1797 = vadd.f32 %v1684, %v1796
        %1798 = vmatmul.f32.gmra.mxu0 %v808
        %v1799 = vpop.f32.mrf.mxu0
        %v1800 = vadd.f32 %v1687, %v1799
        %1801 = vmatmul.f32.gmra.mxu0 %v817
        %v1802 = vpop.f32.mrf.mxu0
        %v1803 = vadd.f32 %v1690, %v1802
        %1804 = vmatmul.f32.gmra.mxu0 %v826
        %v1805 = vpop.f32.mrf.mxu0
        %v1806 = vadd.f32 %v1693, %v1805
        %1807 = vmatmul.f32.gmra.mxu0 %v835
        %v1808 = vpop.f32.mrf.mxu0
        %v1809 = vadd.f32 %v1696, %v1808
        %1810 = vmatmul.f32.gmra.mxu0 %v844
        %v1811 = vpop.f32.mrf.mxu0
        %v1812 = vadd.f32 %v1699, %v1811
        %1813 = vmatmul.f32.gmra.mxu0 %v853
        %v1814 = vpop.f32.mrf.mxu0
        %v1815 = vadd.f32 %v1702, %v1814
        %1816 = vmatmul.f32.gmra.mxu0 %v862
        %v1817 = vpop.f32.mrf.mxu0
        %v1818 = vadd.f32 %v1705, %v1817
        %1819 = vmatmul.f32.gmra.mxu0 %v871
        %v1820 = vpop.f32.mrf.mxu0
        %v1821 = vadd.f32 %v1708, %v1820
        %1822 = vmatmul.f32.gmra.mxu0 %v880
        %v1823 = vpop.f32.mrf.mxu0
        %v1824 = vadd.f32 %v1711, %v1823
        %1825 = vmatmul.f32.gmra.mxu0 %v889
        %v1826 = vpop.f32.mrf.mxu0
        %v1827 = vadd.f32 %v1714, %v1826
        %1828 = vmatmul.f32.gmra.mxu0 %v898
        %v1829 = vpop.f32.mrf.mxu0
        %v1830 = vadd.f32 %v1717, %v1829
        %1831 = vmatmul.f32.gmra.mxu0 %v907
        %v1832 = vpop.f32.mrf.mxu0
        %v1833 = vadd.f32 %v1720, %v1832
        %1834 = vmatmul.f32.gmra.mxu0 %v916
        %v1835 = vpop.f32.mrf.mxu0
        %v1836 = vadd.f32 %v1723, %v1835
        %1837 = vmatmul.f32.gmra.mxu0 %v925
        %v1838 = vpop.f32.mrf.mxu0
        %v1839 = vadd.f32 %v1726, %v1838
        %1840 = vmatmul.f32.gmra.mxu0 %v934
        %v1841 = vpop.f32.mrf.mxu0
        %v1842 = vadd.f32 %v1729, %v1841
        %1843 = vmatmul.f32.gmra.mxu0 %v943
        %v1844 = vpop.f32.mrf.mxu0
        %v1845 = vadd.f32 %v1732, %v1844
        %1846 = vmatmul.f32.gmra.mxu0 %v952
        %v1847 = vpop.f32.mrf.mxu0
        %v1848 = vadd.f32 %v1735, %v1847
        %1849 = vmatmul.f32.gmra.mxu0 %v961
        %v1850 = vpop.f32.mrf.mxu0
        %v1851 = vadd.f32 %v1738, %v1850
        %1852 = vmatmul.f32.gmra.mxu0 %v970
        %v1853 = vpop.f32.mrf.mxu0
        %v1854 = vadd.f32 %v1741, %v1853
        %1855 = vmatmul.f32.gmra.mxu0 %v979
        %v1856 = vpop.f32.mrf.mxu0
        %v1857 = vadd.f32 %v1744, %v1856
        %1858 = vmatmul.f32.gmra.mxu0 %v988
        %v1859 = vpop.f32.mrf.mxu0
        %v1860 = vadd.f32 %v1747, %v1859
        %1861 = vmatmul.f32.gmra.mxu0 %v997
        %v1862 = vpop.f32.mrf.mxu0
        %v1863 = vadd.f32 %v1750, %v1862
        %1864 = vmatmul.f32.gmra.mxu0 %v1006
        %v1865 = vpop.f32.mrf.mxu0
        %v1866 = vadd.f32 %v1753, %v1865
        %1867 = vmatmul.f32.gmra.mxu0 %v1015
        %v1868 = vpop.f32.mrf.mxu0
        %v1869 = vadd.f32 %v1756, %v1868
        %1870 = vmatmul.f32.gmra.mxu0 %v1024
        %v1871 = vpop.f32.mrf.mxu0
        %v1872 = vadd.f32 %v1759, %v1871
        %1873 = vmatmul.f32.gmra.mxu0 %v1033
        %v1874 = vpop.f32.mrf.mxu0
        %v1875 = vadd.f32 %v1762, %v1874
        %1876 = vmatmul.f32.gmra.mxu0 %v1042
        %v1877 = vpop.f32.mrf.mxu0
        %v1878 = vadd.f32 %v1765, %v1877
        %1879 = vmatmul.f32.gmra.mxu0 %v1051
        %v1880 = vpop.f32.mrf.mxu0
        %v1881 = vadd.f32 %v1768, %v1880
        %1882 = vmatmul.f32.gmra.mxu0 %v1060
        %v1883 = vpop.f32.mrf.mxu0
        %v1884 = vadd.f32 %v1771, %v1883
        %1885 = vdwg.mxu0
        %1886 = vmatpush.msra.mxu0 %v1175
        %1887 = vmatpush.msra.mxu0 %v1174
        %1888 = vmatpush.msra.mxu0 %v1173
        %1889 = vmatpush.msra.mxu0 %v1172
        %1890 = vmatpush.msra.mxu0 %v1171
        %1891 = vmatpush.msra.mxu0 %v1170
        %1892 = vmatpush.msra.mxu0 %v1169
        %1893 = vmatpush.msra.mxu0 %v1168
        %1894 = vmatpush.msra.mxu0 %v1167
        %1895 = vmatpush.msra.mxu0 %v1166
        %1896 = vmatpush.msra.mxu0 %v1165
        %1897 = vmatpush.msra.mxu0 %v1164
        %1898 = vmatpush.msra.mxu0 %v1163
        %1899 = vmatpush.msra.mxu0 %v1162
        %1900 = vmatpush.msra.mxu0 %v1161
        %1901 = vmatpush.msra.mxu0 %v1160
        %1902 = vmatmul.f32.gmra.mxu0 %v782
        %v1903 = vpop.f32.mrf.mxu0
        %v1904 = vadd.f32 %v1791, %v1903
        %1905 = vmatmul.f32.gmra.mxu0 %v791
        %v1906 = vpop.f32.mrf.mxu0
        %v1907 = vadd.f32 %v1794, %v1906
        %1908 = vmatmul.f32.gmra.mxu0 %v800
        %v1909 = vpop.f32.mrf.mxu0
        %v1910 = vadd.f32 %v1797, %v1909
        %1911 = vmatmul.f32.gmra.mxu0 %v809
        %v1912 = vpop.f32.mrf.mxu0
        %v1913 = vadd.f32 %v1800, %v1912
        %1914 = vmatmul.f32.gmra.mxu0 %v818
        %v1915 = vpop.f32.mrf.mxu0
        %v1916 = vadd.f32 %v1803, %v1915
        %1917 = vmatmul.f32.gmra.mxu0 %v827
        %v1918 = vpop.f32.mrf.mxu0
        %v1919 = vadd.f32 %v1806, %v1918
        %1920 = vmatmul.f32.gmra.mxu0 %v836
        %v1921 = vpop.f32.mrf.mxu0
        %v1922 = vadd.f32 %v1809, %v1921
        %1923 = vmatmul.f32.gmra.mxu0 %v845
        %v1924 = vpop.f32.mrf.mxu0
        %v1925 = vadd.f32 %v1812, %v1924
        %1926 = vmatmul.f32.gmra.mxu0 %v854
        %v1927 = vpop.f32.mrf.mxu0
        %v1928 = vadd.f32 %v1815, %v1927
        %1929 = vmatmul.f32.gmra.mxu0 %v863
        %v1930 = vpop.f32.mrf.mxu0
        %v1931 = vadd.f32 %v1818, %v1930
        %1932 = vmatmul.f32.gmra.mxu0 %v872
        %v1933 = vpop.f32.mrf.mxu0
        %v1934 = vadd.f32 %v1821, %v1933
        %1935 = vmatmul.f32.gmra.mxu0 %v881
        %v1936 = vpop.f32.mrf.mxu0
        %v1937 = vadd.f32 %v1824, %v1936
        %1938 = vmatmul.f32.gmra.mxu0 %v890
        %v1939 = vpop.f32.mrf.mxu0
        %v1940 = vadd.f32 %v1827, %v1939
        %1941 = vmatmul.f32.gmra.mxu0 %v899
        %v1942 = vpop.f32.mrf.mxu0
        %v1943 = vadd.f32 %v1830, %v1942
        %1944 = vmatmul.f32.gmra.mxu0 %v908
        %v1945 = vpop.f32.mrf.mxu0
        %v1946 = vadd.f32 %v1833, %v1945
        %1947 = vmatmul.f32.gmra.mxu0 %v917
        %v1948 = vpop.f32.mrf.mxu0
        %v1949 = vadd.f32 %v1836, %v1948
        %1950 = vmatmul.f32.gmra.mxu0 %v926
        %v1951 = vpop.f32.mrf.mxu0
        %v1952 = vadd.f32 %v1839, %v1951
        %1953 = vmatmul.f32.gmra.mxu0 %v935
        %v1954 = vpop.f32.mrf.mxu0
        %v1955 = vadd.f32 %v1842, %v1954
        %1956 = vmatmul.f32.gmra.mxu0 %v944
        %v1957 = vpop.f32.mrf.mxu0
        %v1958 = vadd.f32 %v1845, %v1957
        %1959 = vmatmul.f32.gmra.mxu0 %v953
        %v1960 = vpop.f32.mrf.mxu0
        %v1961 = vadd.f32 %v1848, %v1960
        %1962 = vmatmul.f32.gmra.mxu0 %v962
        %v1963 = vpop.f32.mrf.mxu0
        %v1964 = vadd.f32 %v1851, %v1963
        %1965 = vmatmul.f32.gmra.mxu0 %v971
        %v1966 = vpop.f32.mrf.mxu0
        %v1967 = vadd.f32 %v1854, %v1966
        %1968 = vmatmul.f32.gmra.mxu0 %v980
        %v1969 = vpop.f32.mrf.mxu0
        %v1970 = vadd.f32 %v1857, %v1969
        %1971 = vmatmul.f32.gmra.mxu0 %v989
        %v1972 = vpop.f32.mrf.mxu0
        %v1973 = vadd.f32 %v1860, %v1972
        %1974 = vmatmul.f32.gmra.mxu0 %v998
        %v1975 = vpop.f32.mrf.mxu0
        %v1976 = vadd.f32 %v1863, %v1975
        %1977 = vmatmul.f32.gmra.mxu0 %v1007
        %v1978 = vpop.f32.mrf.mxu0
        %v1979 = vadd.f32 %v1866, %v1978
        %1980 = vmatmul.f32.gmra.mxu0 %v1016
        %v1981 = vpop.f32.mrf.mxu0
        %v1982 = vadd.f32 %v1869, %v1981
        %1983 = vmatmul.f32.gmra.mxu0 %v1025
        %v1984 = vpop.f32.mrf.mxu0
        %v1985 = vadd.f32 %v1872, %v1984
        %1986 = vmatmul.f32.gmra.mxu0 %v1034
        %v1987 = vpop.f32.mrf.mxu0
        %v1988 = vadd.f32 %v1875, %v1987
        %1989 = vmatmul.f32.gmra.mxu0 %v1043
        %v1990 = vpop.f32.mrf.mxu0
        %v1991 = vadd.f32 %v1878, %v1990
        %1992 = vmatmul.f32.gmra.mxu0 %v1052
        %v1993 = vpop.f32.mrf.mxu0
        %v1994 = vadd.f32 %v1881, %v1993
        %1995 = vmatmul.f32.gmra.mxu0 %v1061
        %v1996 = vpop.f32.mrf.mxu0
        %v1997 = vadd.f32 %v1884, %v1996
        %1998 = vdwg.mxu0
        %1999 = vmatpush.msra.mxu0 %v1191
        %2000 = vmatpush.msra.mxu0 %v1190
        %2001 = vmatpush.msra.mxu0 %v1189
        %2002 = vmatpush.msra.mxu0 %v1188
        %2003 = vmatpush.msra.mxu0 %v1187
        %2004 = vmatpush.msra.mxu0 %v1186
        %2005 = vmatpush.msra.mxu0 %v1185
        %2006 = vmatpush.msra.mxu0 %v1184
        %2007 = vmatpush.msra.mxu0 %v1183
        %2008 = vmatpush.msra.mxu0 %v1182
        %2009 = vmatpush.msra.mxu0 %v1181
        %2010 = vmatpush.msra.mxu0 %v1180
        %2011 = vmatpush.msra.mxu0 %v1179
        %2012 = vmatpush.msra.mxu0 %v1178
        %2013 = vmatpush.msra.mxu0 %v1177
        %2014 = vmatpush.msra.mxu0 %v1176
        %2015 = vmatmul.f32.gmra.mxu0 %v783
        %v2016 = vpop.f32.mrf.mxu0
        %v2017 = vadd.f32 %v1904, %v2016
        %2018 = vmatmul.f32.gmra.mxu0 %v792
        %v2019 = vpop.f32.mrf.mxu0
        %v2020 = vadd.f32 %v1907, %v2019
        %2021 = vmatmul.f32.gmra.mxu0 %v801
        %v2022 = vpop.f32.mrf.mxu0
        %v2023 = vadd.f32 %v1910, %v2022
        %2024 = vmatmul.f32.gmra.mxu0 %v810
        %v2025 = vpop.f32.mrf.mxu0
        %v2026 = vadd.f32 %v1913, %v2025
        %2027 = vmatmul.f32.gmra.mxu0 %v819
        %v2028 = vpop.f32.mrf.mxu0
        %v2029 = vadd.f32 %v1916, %v2028
        %2030 = vmatmul.f32.gmra.mxu0 %v828
        %v2031 = vpop.f32.mrf.mxu0
        %v2032 = vadd.f32 %v1919, %v2031
        %2033 = vmatmul.f32.gmra.mxu0 %v837
        %v2034 = vpop.f32.mrf.mxu0
        %v2035 = vadd.f32 %v1922, %v2034
        %2036 = vmatmul.f32.gmra.mxu0 %v846
        %v2037 = vpop.f32.mrf.mxu0
        %v2038 = vadd.f32 %v1925, %v2037
        %2039 = vmatmul.f32.gmra.mxu0 %v855
        %v2040 = vpop.f32.mrf.mxu0
        %v2041 = vadd.f32 %v1928, %v2040
        %2042 = vmatmul.f32.gmra.mxu0 %v864
        %v2043 = vpop.f32.mrf.mxu0
        %v2044 = vadd.f32 %v1931, %v2043
        %2045 = vmatmul.f32.gmra.mxu0 %v873
        %v2046 = vpop.f32.mrf.mxu0
        %v2047 = vadd.f32 %v1934, %v2046
        %2048 = vmatmul.f32.gmra.mxu0 %v882
        %v2049 = vpop.f32.mrf.mxu0
        %v2050 = vadd.f32 %v1937, %v2049
        %2051 = vmatmul.f32.gmra.mxu0 %v891
        %v2052 = vpop.f32.mrf.mxu0
        %v2053 = vadd.f32 %v1940, %v2052
        %2054 = vmatmul.f32.gmra.mxu0 %v900
        %v2055 = vpop.f32.mrf.mxu0
        %v2056 = vadd.f32 %v1943, %v2055
        %2057 = vmatmul.f32.gmra.mxu0 %v909
        %v2058 = vpop.f32.mrf.mxu0
        %v2059 = vadd.f32 %v1946, %v2058
        %2060 = vmatmul.f32.gmra.mxu0 %v918
        %v2061 = vpop.f32.mrf.mxu0
        %v2062 = vadd.f32 %v1949, %v2061
        %2063 = vmatmul.f32.gmra.mxu0 %v927
        %v2064 = vpop.f32.mrf.mxu0
        %v2065 = vadd.f32 %v1952, %v2064
        %2066 = vmatmul.f32.gmra.mxu0 %v936
        %v2067 = vpop.f32.mrf.mxu0
        %v2068 = vadd.f32 %v1955, %v2067
        %2069 = vmatmul.f32.gmra.mxu0 %v945
        %v2070 = vpop.f32.mrf.mxu0
        %v2071 = vadd.f32 %v1958, %v2070
        %2072 = vmatmul.f32.gmra.mxu0 %v954
        %v2073 = vpop.f32.mrf.mxu0
        %v2074 = vadd.f32 %v1961, %v2073
        %2075 = vmatmul.f32.gmra.mxu0 %v963
        %v2076 = vpop.f32.mrf.mxu0
        %v2077 = vadd.f32 %v1964, %v2076
        %2078 = vmatmul.f32.gmra.mxu0 %v972
        %v2079 = vpop.f32.mrf.mxu0
        %v2080 = vadd.f32 %v1967, %v2079
        %2081 = vmatmul.f32.gmra.mxu0 %v981
        %v2082 = vpop.f32.mrf.mxu0
        %v2083 = vadd.f32 %v1970, %v2082
        %2084 = vmatmul.f32.gmra.mxu0 %v990
        %v2085 = vpop.f32.mrf.mxu0
        %v2086 = vadd.f32 %v1973, %v2085
        %2087 = vmatmul.f32.gmra.mxu0 %v999
        %v2088 = vpop.f32.mrf.mxu0
        %v2089 = vadd.f32 %v1976, %v2088
        %2090 = vmatmul.f32.gmra.mxu0 %v1008
        %v2091 = vpop.f32.mrf.mxu0
        %v2092 = vadd.f32 %v1979, %v2091
        %2093 = vmatmul.f32.gmra.mxu0 %v1017
        %v2094 = vpop.f32.mrf.mxu0
        %v2095 = vadd.f32 %v1982, %v2094
        %2096 = vmatmul.f32.gmra.mxu0 %v1026
        %v2097 = vpop.f32.mrf.mxu0
        %v2098 = vadd.f32 %v1985, %v2097
        %2099 = vmatmul.f32.gmra.mxu0 %v1035
        %v2100 = vpop.f32.mrf.mxu0
        %v2101 = vadd.f32 %v1988, %v2100
        %2102 = vmatmul.f32.gmra.mxu0 %v1044
        %v2103 = vpop.f32.mrf.mxu0
        %v2104 = vadd.f32 %v1991, %v2103
        %2105 = vmatmul.f32.gmra.mxu0 %v1053
        %v2106 = vpop.f32.mrf.mxu0
        %v2107 = vadd.f32 %v1994, %v2106
        %2108 = vmatmul.f32.gmra.mxu0 %v1062
        %v2109 = vpop.f32.mrf.mxu0
        %v2110 = vadd.f32 %v1997, %v2109
        %2111 = vdwg.mxu0
        %2112 = vmatpush.msra.mxu0 %v1207
        %2113 = vmatpush.msra.mxu0 %v1206
        %2114 = vmatpush.msra.mxu0 %v1205
        %2115 = vmatpush.msra.mxu0 %v1204
        %2116 = vmatpush.msra.mxu0 %v1203
        %2117 = vmatpush.msra.mxu0 %v1202
        %2118 = vmatpush.msra.mxu0 %v1201
        %2119 = vmatpush.msra.mxu0 %v1200
        %2120 = vmatpush.msra.mxu0 %v1199
        %2121 = vmatpush.msra.mxu0 %v1198
        %2122 = vmatpush.msra.mxu0 %v1197
        %2123 = vmatpush.msra.mxu0 %v1196
        %2124 = vmatpush.msra.mxu0 %v1195
        %2125 = vmatpush.msra.mxu0 %v1194
        %2126 = vmatpush.msra.mxu0 %v1193
        %2127 = vmatpush.msra.mxu0 %v1192
        %2128 = vmatmul.f32.gmra.mxu0 %v784
        %v2129 = vpop.f32.mrf.mxu0
        %v2130 = vadd.f32 %v2017, %v2129
        %2131 = vmatmul.f32.gmra.mxu0 %v793
        %v2132 = vpop.f32.mrf.mxu0
        %v2133 = vadd.f32 %v2020, %v2132
        %2134 = vmatmul.f32.gmra.mxu0 %v802
        %v2135 = vpop.f32.mrf.mxu0
        %v2136 = vadd.f32 %v2023, %v2135
        %2137 = vmatmul.f32.gmra.mxu0 %v811
        %v2138 = vpop.f32.mrf.mxu0
        %v2139 = vadd.f32 %v2026, %v2138
        %2140 = vmatmul.f32.gmra.mxu0 %v820
        %v2141 = vpop.f32.mrf.mxu0
        %v2142 = vadd.f32 %v2029, %v2141
        %2143 = vmatmul.f32.gmra.mxu0 %v829
        %v2144 = vpop.f32.mrf.mxu0
        %v2145 = vadd.f32 %v2032, %v2144
        %2146 = vmatmul.f32.gmra.mxu0 %v838
        %v2147 = vpop.f32.mrf.mxu0
        %v2148 = vadd.f32 %v2035, %v2147
        %2149 = vmatmul.f32.gmra.mxu0 %v847
        %v2150 = vpop.f32.mrf.mxu0
        %v2151 = vadd.f32 %v2038, %v2150
        %2152 = vmatmul.f32.gmra.mxu0 %v856
        %v2153 = vpop.f32.mrf.mxu0
        %v2154 = vadd.f32 %v2041, %v2153
        %2155 = vmatmul.f32.gmra.mxu0 %v865
        %v2156 = vpop.f32.mrf.mxu0
        %v2157 = vadd.f32 %v2044, %v2156
        %2158 = vmatmul.f32.gmra.mxu0 %v874
        %v2159 = vpop.f32.mrf.mxu0
        %v2160 = vadd.f32 %v2047, %v2159
        %2161 = vmatmul.f32.gmra.mxu0 %v883
        %v2162 = vpop.f32.mrf.mxu0
        %v2163 = vadd.f32 %v2050, %v2162
        %2164 = vmatmul.f32.gmra.mxu0 %v892
        %v2165 = vpop.f32.mrf.mxu0
        %v2166 = vadd.f32 %v2053, %v2165
        %2167 = vmatmul.f32.gmra.mxu0 %v901
        %v2168 = vpop.f32.mrf.mxu0
        %v2169 = vadd.f32 %v2056, %v2168
        %2170 = vmatmul.f32.gmra.mxu0 %v910
        %v2171 = vpop.f32.mrf.mxu0
        %v2172 = vadd.f32 %v2059, %v2171
        %2173 = vmatmul.f32.gmra.mxu0 %v919
        %v2174 = vpop.f32.mrf.mxu0
        %v2175 = vadd.f32 %v2062, %v2174
        %2176 = vmatmul.f32.gmra.mxu0 %v928
        %v2177 = vpop.f32.mrf.mxu0
        %v2178 = vadd.f32 %v2065, %v2177
        %2179 = vmatmul.f32.gmra.mxu0 %v937
        %v2180 = vpop.f32.mrf.mxu0
        %v2181 = vadd.f32 %v2068, %v2180
        %2182 = vmatmul.f32.gmra.mxu0 %v946
        %v2183 = vpop.f32.mrf.mxu0
        %v2184 = vadd.f32 %v2071, %v2183
        %2185 = vmatmul.f32.gmra.mxu0 %v955
        %v2186 = vpop.f32.mrf.mxu0
        %v2187 = vadd.f32 %v2074, %v2186
        %2188 = vmatmul.f32.gmra.mxu0 %v964
        %v2189 = vpop.f32.mrf.mxu0
        %v2190 = vadd.f32 %v2077, %v2189
        %2191 = vmatmul.f32.gmra.mxu0 %v973
        %v2192 = vpop.f32.mrf.mxu0
        %v2193 = vadd.f32 %v2080, %v2192
        %2194 = vmatmul.f32.gmra.mxu0 %v982
        %v2195 = vpop.f32.mrf.mxu0
        %v2196 = vadd.f32 %v2083, %v2195
        %2197 = vmatmul.f32.gmra.mxu0 %v991
        %v2198 = vpop.f32.mrf.mxu0
        %v2199 = vadd.f32 %v2086, %v2198
        %2200 = vmatmul.f32.gmra.mxu0 %v1000
        %v2201 = vpop.f32.mrf.mxu0
        %v2202 = vadd.f32 %v2089, %v2201
        %2203 = vmatmul.f32.gmra.mxu0 %v1009
        %v2204 = vpop.f32.mrf.mxu0
        %v2205 = vadd.f32 %v2092, %v2204
        %2206 = vmatmul.f32.gmra.mxu0 %v1018
        %v2207 = vpop.f32.mrf.mxu0
        %v2208 = vadd.f32 %v2095, %v2207
        %2209 = vmatmul.f32.gmra.mxu0 %v1027
        %v2210 = vpop.f32.mrf.mxu0
        %v2211 = vadd.f32 %v2098, %v2210
        %2212 = vmatmul.f32.gmra.mxu0 %v1036
        %v2213 = vpop.f32.mrf.mxu0
        %v2214 = vadd.f32 %v2101, %v2213
        %2215 = vmatmul.f32.gmra.mxu0 %v1045
        %v2216 = vpop.f32.mrf.mxu0
        %v2217 = vadd.f32 %v2104, %v2216
        %2218 = vmatmul.f32.gmra.mxu0 %v1054
        %v2219 = vpop.f32.mrf.mxu0
        %v2220 = vadd.f32 %v2107, %v2219
        %2221 = vmatmul.f32.gmra.mxu0 %v1063
        %v2222 = vpop.f32.mrf.mxu0
        %v2223 = vadd.f32 %v2110, %v2222
        %2224 = vdwg.mxu0
        %v2225 = vadd.f32 %v2130, %v2133
        %v2226 = vadd.f32 %v2225, %v2136
        %v2227 = vadd.f32 %v2226, %v2139
        %v2228 = vadd.f32 %v2227, %v2142
        %v2229 = vadd.f32 %v2228, %v2145
        %v2230 = vadd.f32 %v2229, %v2148
        %v2231 = vadd.f32 %v2230, %v2151
        %v2232 = vadd.f32 %v2231, %v2154
        %v2233 = vadd.f32 %v2232, %v2157
        %v2234 = vadd.f32 %v2233, %v2160
        %v2235 = vadd.f32 %v2234, %v2163
        %v2236 = vadd.f32 %v2235, %v2166
        %v2237 = vadd.f32 %v2236, %v2169
        %v2238 = vadd.f32 %v2237, %v2172
        %v2239 = vadd.f32 %v2238, %v2175
        %v2240 = vadd.f32 %v2239, %v2178
        %v2241 = vadd.f32 %v2240, %v2181
        %v2242 = vadd.f32 %v2241, %v2184
        %v2243 = vadd.f32 %v2242, %v2187
        %v2244 = vadd.f32 %v2243, %v2190
        %v2245 = vadd.f32 %v2244, %v2193
        %v2246 = vadd.f32 %v2245, %v2196
        %v2247 = vadd.f32 %v2246, %v2199
        %v2248 = vadd.f32 %v2247, %v2202
        %v2249 = vadd.f32 %v2248, %v2205
        %v2250 = vadd.f32 %v2249, %v2208
        %v2251 = vadd.f32 %v2250, %v2211
        %v2252 = vadd.f32 %v2251, %v2214
        %v2253 = vadd.f32 %v2252, %v2217
        %v2254 = vadd.f32 %v2253, %v2220
        %v2255 = vadd.f32 %v2254, %v2223
        %v2256 = vrot.slane %v2255, 4
        %v2257 = vadd.f32 %v2255, %v2256
        %v2258 = vrot.slane %v2257, 2
        %v2259 = vadd.f32 %v2257, %v2258
        %v2260 = vrot.slane %v2259, 1
        %v2261 = vadd.f32 %v2259, %v2260
        %v2262 = vmul.f32 %v2130, %v2130
        %v2263 = vmul.f32 %v2133, %v2133
        %v2264 = vmul.f32 %v2136, %v2136
        %v2265 = vmul.f32 %v2139, %v2139
        %v2266 = vmul.f32 %v2142, %v2142
        %v2267 = vmul.f32 %v2145, %v2145
        %v2268 = vmul.f32 %v2148, %v2148
        %v2269 = vmul.f32 %v2151, %v2151
        %v2270 = vmul.f32 %v2154, %v2154
        %v2271 = vmul.f32 %v2157, %v2157
        %v2272 = vmul.f32 %v2160, %v2160
        %v2273 = vmul.f32 %v2163, %v2163
        %v2274 = vmul.f32 %v2166, %v2166
        %v2275 = vmul.f32 %v2169, %v2169
        %v2276 = vmul.f32 %v2172, %v2172
        %v2277 = vmul.f32 %v2175, %v2175
        %v2278 = vmul.f32 %v2178, %v2178
        %v2279 = vmul.f32 %v2181, %v2181
        %v2280 = vmul.f32 %v2184, %v2184
        %v2281 = vmul.f32 %v2187, %v2187
        %v2282 = vmul.f32 %v2190, %v2190
        %v2283 = vmul.f32 %v2193, %v2193
        %v2284 = vmul.f32 %v2196, %v2196
        %v2285 = vmul.f32 %v2199, %v2199
        %v2286 = vmul.f32 %v2202, %v2202
        %v2287 = vmul.f32 %v2205, %v2205
        %v2288 = vmul.f32 %v2208, %v2208
        %v2289 = vmul.f32 %v2211, %v2211
        %v2290 = vmul.f32 %v2214, %v2214
        %v2291 = vmul.f32 %v2217, %v2217
        %v2292 = vmul.f32 %v2220, %v2220
        %v2293 = vmul.f32 %v2223, %v2223
        %v2294 = vadd.f32 %v2262, %v2263
        %v2295 = vadd.f32 %v2294, %v2264
        %v2296 = vadd.f32 %v2295, %v2265
        %v2297 = vadd.f32 %v2296, %v2266
        %v2298 = vadd.f32 %v2297, %v2267
        %v2299 = vadd.f32 %v2298, %v2268
        %v2300 = vadd.f32 %v2299, %v2269
        %v2301 = vadd.f32 %v2300, %v2270
        %v2302 = vadd.f32 %v2301, %v2271
        %v2303 = vadd.f32 %v2302, %v2272
        %v2304 = vadd.f32 %v2303, %v2273
        %v2305 = vadd.f32 %v2304, %v2274
        %v2306 = vadd.f32 %v2305, %v2275
        %v2307 = vadd.f32 %v2306, %v2276
        %v2308 = vadd.f32 %v2307, %v2277
        %v2309 = vadd.f32 %v2308, %v2278
        %v2310 = vadd.f32 %v2309, %v2279
        %v2311 = vadd.f32 %v2310, %v2280
        %v2312 = vadd.f32 %v2311, %v2281
        %v2313 = vadd.f32 %v2312, %v2282
        %v2314 = vadd.f32 %v2313, %v2283
        %v2315 = vadd.f32 %v2314, %v2284
        %v2316 = vadd.f32 %v2315, %v2285
        %v2317 = vadd.f32 %v2316, %v2286
        %v2318 = vadd.f32 %v2317, %v2287
        %v2319 = vadd.f32 %v2318, %v2288
        %v2320 = vadd.f32 %v2319, %v2289
        %v2321 = vadd.f32 %v2320, %v2290
        %v2322 = vadd.f32 %v2321, %v2291
        %v2323 = vadd.f32 %v2322, %v2292
        %v2324 = vadd.f32 %v2323, %v2293
        %v2325 = vrot.slane %v2324, 4
        %v2326 = vadd.f32 %v2324, %v2325
        %v2327 = vrot.slane %v2326, 2
        %v2328 = vadd.f32 %v2326, %v2327
        %v2329 = vrot.slane %v2328, 1
        %v2330 = vadd.f32 %v2328, %v2329
        %v2331 = vsel %vm282, %v2261, %v2330
        %2332 = vst [vmem:[%s218] sm:$0x3] %v2331
        %2333 = vst [vmem:[%s211] sm:$0xff] %v2130
        %2334 = vst [vmem:[%s211 + $0x8] sm:$0xff] %v2133
        %2335 = vst [vmem:[%s211 + $0x10] sm:$0xff] %v2136
        %2336 = vst [vmem:[%s211 + $0x18] sm:$0xff] %v2139
        %2337 = vst [vmem:[%s211 + $0x20] sm:$0xff] %v2142
        %2338 = vst [vmem:[%s211 + $0x28] sm:$0xff] %v2145
        %2339 = vst [vmem:[%s211 + $0x30] sm:$0xff] %v2148
        %2340 = vst [vmem:[%s211 + $0x38] sm:$0xff] %v2151
        %2341 = vst [vmem:[%s211 + $0x40] sm:$0xff] %v2154
        %2342 = vst [vmem:[%s211 + $0x48] sm:$0xff] %v2157
        %2343 = vst [vmem:[%s211 + $0x50] sm:$0xff] %v2160
        %2344 = vst [vmem:[%s211 + $0x58] sm:$0xff] %v2163
        %2345 = vst [vmem:[%s211 + $0x60] sm:$0xff] %v2166
        %2346 = vst [vmem:[%s211 + $0x68] sm:$0xff] %v2169
        %2347 = vst [vmem:[%s211 + $0x70] sm:$0xff] %v2172
        %2348 = vst [vmem:[%s211 + $0x78] sm:$0xff] %v2175
        %2349 = vst [vmem:[%s211 + $0x80] sm:$0xff] %v2178
        %2350 = vst [vmem:[%s211 + $0x88] sm:$0xff] %v2181
        %2351 = vst [vmem:[%s211 + $0x90] sm:$0xff] %v2184
        %2352 = vst [vmem:[%s211 + $0x98] sm:$0xff] %v2187
        %2353 = vst [vmem:[%s211 + $0xa0] sm:$0xff] %v2190
        %2354 = vst [vmem:[%s211 + $0xa8] sm:$0xff] %v2193
        %2355 = vst [vmem:[%s211 + $0xb0] sm:$0xff] %v2196
        %2356 = vst [vmem:[%s211 + $0xb8] sm:$0xff] %v2199
        %2357 = vst [vmem:[%s211 + $0xc0] sm:$0xff] %v2202
        %2358 = vst [vmem:[%s211 + $0xc8] sm:$0xff] %v2205
        %2359 = vst [vmem:[%s211 + $0xd0] sm:$0xff] %v2208
        %2360 = vst [vmem:[%s211 + $0xd8] sm:$0xff] %v2211
        %2361 = vst [vmem:[%s211 + $0xe0] sm:$0xff] %v2214
        %2362 = vst [vmem:[%s211 + $0xe8] sm:$0xff] %v2217
        %2363 = vst [vmem:[%s211 + $0xf0] sm:$0xff] %v2220
        %2364 = vst [vmem:[%s211 + $0xf8] sm:$0xff] %v2223
        %s2365 = sand.u32 %s80, 1
        %s2366 = scalar_lea.sflag [#allocation5], %s2365
        %s2367 = sand.u32 %s80, 1
        %s2368 = smul.addr %s2367, 256
        %s2369 = scalar_lea.vmem [#allocation8], %s2368
        %s2370 = sand.u32 %s106, 1
        %s2371 = scalar_lea.sflag [#allocation10], %s2370
        %s2372 = sand.u32 %s106, 1
        %s2373 = smul.addr %s2372, 2
        %s2374 = scalar_lea.vmem [#allocation9], %s2373
        // Predicated region
        $region37: #{tpu_custom_call.1} parent=27 // pred_check
          %p2375 = pneg %p90
        $region38: #{tpu_custom_call.1} parent=27 // pred_check_branch
          %2377 = sbr.rel (%p2375) target = $region40
        $region39: #{tpu_custom_call.1} parent=27 // pred_region
          %2379 = vsyncadd %s2366, 0
          %s2380 = smul.addr %s25, 32
          %s2381 = smul.addr %s2380, 8
          %s2382 = scalar_lea.hbm %s2, %s2381
          %s2383 = sshll.u32 %s2369, 4
          %s2384 = int_to_ptr.vmem [resolvable:$true] %s2383
          %s2385 = sshll.u32 %s2382, 4
          %s2386 = int_to_ptr.hbm [resolvable:$true] %s2385
          %2391 = dma.vmem_to_hbm [thread:$0]  %s2384, 4096, %s2386, %s2366, 128, 128, 8
        $region40: #{tpu_custom_call.1} parent=27 // pred_fallthru
          _
        // Predicated region
        $region41: #{tpu_custom_call.1} parent=27 // pred_check
          %p2392 = pneg %p116
        $region42: #{tpu_custom_call.1} parent=27 // pred_check_branch
          %2394 = sbr.rel (%p2392) target = $region44
        $region43: #{tpu_custom_call.1} parent=27 // pred_region
          %2396 = vsyncadd %s2371, 0
          %s2397 = smul.addr %s25, 2
          %s2398 = scalar_lea.hbm %s3, %s2397
          %s2400 = sshll.u32 %s2374, 4
          %s2401 = int_to_ptr.vmem [resolvable:$true] %s2400
          %s2402 = sshll.u32 %s2398, 4
          %s2403 = int_to_ptr.hbm [resolvable:$true] %s2402
          %2405 = dma.vmem_to_hbm [thread:$0]  %s2401, 32, %s2403, %s2371
        $region44: #{tpu_custom_call.1} parent=27 // pred_fallthru
          _
      $region28: #{tpu_custom_call.1} parent=5 // pred_fallthru
        _
      %p2406 = scmp.le.s32.totalorder 2, %s20
      // Predicated region
      $region45: #{tpu_custom_call.1} parent=5 // pred_check
        %p2407 = pneg %p2406
      $region46: #{tpu_custom_call.1} parent=5 // pred_check_branch
        %2409 = sbr.rel (%p2407) target = $region48
      $region47: #{tpu_custom_call.1} parent=5 // pred_region
        %s2410 = ssub.s32 %s20, 2
        // Predicated region
        $region49: #{tpu_custom_call.1} parent=47 // pred_check
          %p2411 = pneg %p96
        $region50: #{tpu_custom_call.1} parent=47 // pred_check_branch
          %2413 = sbr.rel (%p2411) target = $region52
        $region51: #{tpu_custom_call.1} parent=47 // pred_region
          %s2414 = sand.u32 %s81, 1
          %s2415 = scalar_lea.sflag [#allocation5], %s2414
          %s2416 = sand.u32 %s81, 1
          %s2417 = smul.addr %s2416, 256
          %s2418 = scalar_lea.vmem [#allocation8], %s2417
          %2420 = dma.done %s2415, 4096
        $region52: #{tpu_custom_call.1} parent=47 // pred_fallthru
          _
        // Predicated region
        $region53: #{tpu_custom_call.1} parent=47 // pred_check
          %p2421 = pneg %p122
        $region54: #{tpu_custom_call.1} parent=47 // pred_check_branch
          %2423 = sbr.rel (%p2421) target = $region56
        $region55: #{tpu_custom_call.1} parent=47 // pred_region
          %s2424 = sand.u32 %s107, 1
          %s2425 = scalar_lea.sflag [#allocation10], %s2424
          %s2426 = sand.u32 %s107, 1
          %s2427 = smul.addr %s2426, 2
          %s2428 = scalar_lea.vmem [#allocation9], %s2427
          %2430 = dma.done %s2425, 32
        $region56: #{tpu_custom_call.1} parent=47 // pred_fallthru
          _
      $region48: #{tpu_custom_call.1} parent=5 // pred_fallthru
        _
    $region6: #{tpu_custom_call.1} parent=1 // loop_footer
      %s24 = sadd.s32 1, %s20
    $region7: #{tpu_custom_call.1} parent=1 // loop_footer_branch
      %19 = sbr.rel target = $region3
    $region8: #{tpu_custom_call.1} parent=1 // loop_exit
      _
    %2431 = vsyncpa [#allocation4], 1
    %s2432 = scalar_lea.sflag [#allocation4], 1
    %2433 = vsyncpa %s2432, 1
    %2434 = vsyncpa [#allocation7], 1
    %2435 = vsyncpa [#allocation5], 1
    %s2436 = scalar_lea.sflag [#allocation5], 1
    %2437 = vsyncpa %s2436, 1
    %2438 = vsyncpa [#allocation10], 1
    %s2439 = scalar_lea.sflag [#allocation10], 1
    %2440 = vsyncpa %s2439, 1

</llo_original>
